<compile_context>
chip_gen: v6e
topology: v6e:2x2x1
jax: 0.10.0
libtpu: 0.0.40
codegen_flags: <defaults>
</compile_context>

<pallas_src>
import functools

import jax
import jax.numpy as jnp
from jax.experimental import pallas as pl
from jax.experimental.pallas import tpu as pltpu


# ----------------------------- tiling helpers --------------------------------

def _batch_tile(n, seq_len, cmax):
    """Batch-tile size for the fused kernel.

    * targets ~2048 (batch*time) rows per grid step to amortize the ~0.35us
      per-step overhead (v5e/v6e: grow toward the 128 MiB VMEM),
    * capped by a ~12 MiB working-set budget so the f32 temporaries + double
      buffers stay inside the default scoped VMEM on v7x (64 MiB physical),
    * >= 2 grid steps whenever the batch allows it (v7x dual TensorCore).
    """
    if n <= 8:
        return n                                    # one step; block dim == full dim
    per_row = seq_len * cmax * 44                   # ~bf16 act + f32 temporaries, bytes
    cap_rows = max(8, (12 * 1024 * 1024) // max(per_row, 1))
    target = max(8, 2048 // max(seq_len, 1))
    nb = min(n, target, cap_rows, max(8, n // 2))
    return max(8, (nb // 8) * 8)


def _const_spec(shape):
    return pl.BlockSpec(shape, lambda i, _nd=len(shape): (0,) * _nd)


# --------------------------- fused Pallas kernel ------------------------------

def _shift_time(z, shift, nb, L):
    """Causal time shift (zero fill) of a (nb*L, C) f32 per-tap matmul result.

    Because the matmul is row-wise, shift(x) @ w == shift(x @ w), so the conv's
    zero padding + Chomp1d is applied to the small f32 tap result instead of
    building an im2col of the (wider) input."""
    if shift == 0:
        return z
    if shift >= L:
        return jnp.zeros_like(z)
    C = z.shape[-1]
    z3 = z.reshape(nb, L, C)
    z3 = jnp.concatenate(
        [jnp.zeros((nb, shift, C), jnp.float32), z3[:, :L - shift, :]], axis=1)
    return z3.reshape(nb * L, C)


def _tcn_fused_kernel(*refs, seq_len, kernel_size, block_cfgs):
    """All TemporalBlocks + (folded) BatchNorm1d + Linear head in one kernel."""
    it = iter(refs)
    x_ref = next(it)
    blk_refs = [(next(it), next(it), next(it), next(it)) for _ in block_cfgs]
    bn_scale_ref, bn_shift_ref = next(it), next(it)
    wl_ref, bl_ref = next(it), next(it)
    norm_ref, o_ref = next(it), next(it)

    L = seq_len
    K = kernel_size
    nb = x_ref.shape[0]

    act_bf = x_ref[...]                               # (nb, L, Cin0) bf16 block input
    act_f32 = None                                    # f32 copy of current activation

    for cfg, (w1_ref, b1_ref, w2_ref, b2_ref) in zip(block_cfgs, blk_refs):
        Cin, Cout = cfg["cin"], cfg["cout"]
        d, has_down = cfg["dilation"], cfg["down"]
        x2d = act_bf.reshape(nb * L, Cin)             # bf16 MXU input (no f32 upcast)

        # conv1 (+ fused 1x1 downsample columns): K accumulated per-tap matmuls.
        acc = None
        for k in range(K):
            z = jnp.dot(x2d, w1_ref[k], preferred_element_type=jnp.float32)
            z = _shift_time(z, (K - 1 - k) * d, nb, L)
            acc = z if acc is None else acc + z
        acc = acc + b1_ref[...]
        h = jnp.maximum(acc[:, :Cout], 0.0)           # relu(conv1)

        if has_down:
            res = acc[:, Cout:]                       # x @ wd + bd (no activation)
        elif act_f32 is not None:
            res = act_f32                             # identity residual (f32)
        else:
            res = x2d.astype(jnp.float32)

        # conv2 on relu(conv1) (chomp == zero fill handled by _shift_time).
        h_bf = h.astype(jnp.bfloat16)
        acc2 = None
        for k in range(K):
            z = jnp.dot(h_bf, w2_ref[k], preferred_element_type=jnp.float32)
            z = _shift_time(z, (K - 1 - k) * d, nb, L)
            acc2 = z if acc2 is None else acc2 + z
        y = jnp.maximum(acc2 + b2_ref[...], 0.0)      # relu(conv2)

        act_f32 = jnp.maximum(y + res, 0.0)           # relu(out + res), (nb*L, Cout)
        act_bf = act_f32.astype(jnp.bfloat16).reshape(nb, L, Cout)

    # ---- head: y1[:, :, -1] -> BatchNorm1d (eval, folded affine) -> Linear ----
    Clast = block_cfgs[-1]["cout"]
    last = act_f32.reshape(nb, L, Clast)[:, L - 1, :]             # (nb, Clast) f32
    normed = last * bn_scale_ref[...] + bn_shift_ref[...]
    norm_ref[...] = normed.astype(norm_ref.dtype)
    # (nb, Clast) x (Clast, O) is negligible; computing all rows keeps the
    # per-tile output mapping trivial (the caller only consumes row 0).
    o_ref[...] = (jnp.dot(normed, wl_ref[...], preferred_element_type=jnp.float32)
                  + bl_ref[...]).astype(o_ref.dtype)


# --------------------------- pallas_call wrapper -------------------------------

def _tcn_pallas(params, x_bf16):
    N, L, Cin0 = x_bf16.shape
    K = params["kernel_size"]
    blocks = params["blocks"]
    Clast = blocks[-1]["cout"]
    O = params["w_lin"].shape[-1]

    cmax = max([Cin0] + [b["w1"].shape[-1] for b in blocks]
               + [b["cout"] for b in blocks])
    nb = _batch_tile(N, L, cmax)
    grid = (pl.cdiv(N, nb),)

    in_specs = [pl.BlockSpec((nb, L, Cin0), lambda i: (i, 0, 0))]
    args = [x_bf16]
    block_cfgs = []
    for blk in blocks:
        for name in ("w1", "b1", "w2", "b2"):
            in_specs.append(_const_spec(blk[name].shape))
            args.append(blk[name])
        block_cfgs.append(dict(cin=blk["cin"], cout=blk["cout"],
                               dilation=blk["dilation"], down=blk["down"]))
    for name in ("bn_scale", "bn_shift", "w_lin", "b_lin"):
        in_specs.append(_const_spec(params[name].shape))
        args.append(params[name])

    weight_bytes = sum(int(a.size) * a.dtype.itemsize for a in args[1:])
    flops = 0
    for blk in blocks:
        cw = blk["w1"].shape[-1]
        flops += 2 * N * L * K * (blk["cin"] * cw + blk["cout"] * blk["cout"])
    flops += 2 * N * Clast * O
    bytes_accessed = int(x_bf16.size) * 2 + N * (Clast + O) * 4 + weight_bytes
    cost = pl.CostEstimate(flops=int(flops), transcendentals=0,
                           bytes_accessed=int(bytes_accessed))

    est = (2 * 2 * nb * L * cmax            # double-buffered bf16 input tile
           + 10 * 4 * nb * L * cmax         # f32 tap results / accumulators / residual
           + 2 * 4 * nb * (Clast + O)       # double-buffered f32 outputs
           + 2 * weight_bytes)
    vmem_limit = int(min(64 * 1024 * 1024, max(32 * 1024 * 1024, 2 * est)))

    kern = functools.partial(_tcn_fused_kernel, seq_len=L, kernel_size=K,
                             block_cfgs=tuple(block_cfgs))

    normalized, o_full = pl.pallas_call(
        kern,
        grid=grid,
        in_specs=in_specs,
        out_specs=(pl.BlockSpec((nb, Clast), lambda i: (i, 0)),
                   pl.BlockSpec((nb, O), lambda i: (i, 0))),
        out_shape=(jax.ShapeDtypeStruct((N, Clast), jnp.float32),
                   jax.ShapeDtypeStruct((N, O), jnp.float32)),
        compiler_params=pltpu.CompilerParams(
            dimension_semantics=("parallel",),
            vmem_limit_bytes=vmem_limit),
        cost_estimate=cost,
    )(*args)
    return normalized, o_full


# --------------------------- Parameters ---------------------------------------

def init_tcn_params(key, input_channels, num_channels, kernel_size, output_size):
    K = kernel_size

    def weightnorm_conv(kk, ci, co):
        kv, kg, kb = jax.random.split(kk, 3)
        v = 0.1 * jax.random.normal(kv, (co, ci, K), jnp.float32)
        g = 1.0 + 0.1 * jax.random.normal(kg, (co,), jnp.float32)
        b = 0.1 * jax.random.normal(kb, (co,), jnp.float32)
        # weight_norm reparameterization: w = g * v / ||v|| (per output channel)
        norm = jnp.sqrt(jnp.sum(v * v, axis=(1, 2), keepdims=True))
        w = g[:, None, None] * v / norm                  # (Cout, Cin, K)
        return jnp.transpose(w, (2, 1, 0)), b            # (K, Cin, Cout), (Cout,)

    params = {"kernel_size": K, "blocks": []}
    c_in = input_channels
    for i, c_out in enumerate(num_channels):
        key, k1, k2, k3, k4 = jax.random.split(key, 5)
        w1, b1 = weightnorm_conv(k1, c_in, c_out)
        w2, b2 = weightnorm_conv(k2, c_out, c_out)
        has_down = c_in != c_out
        if has_down:                                     # fuse 1x1 downsample into conv1
            wd = 0.1 * jax.random.normal(k3, (c_in, c_out), jnp.float32)
            bd = 0.1 * jax.random.normal(k4, (c_out,), jnp.float32)
            wd_taps = jnp.zeros((K, c_in, c_out), jnp.float32).at[K - 1].set(wd)
            w1 = jnp.concatenate([w1, wd_taps], axis=-1)  # (K, Cin, 2*Cout)
            b1 = jnp.concatenate([b1, bd])                # (2*Cout,)
        params["blocks"].append({
            "w1": w1.astype(jnp.bfloat16), "b1": b1.reshape(1, -1),
            "w2": w2.astype(jnp.bfloat16), "b2": b2.reshape(1, -1),
            "dilation": 2 ** i, "cin": c_in, "cout": c_out, "down": has_down})
        c_in = c_out

    C = num_channels[-1]
    key, kg, kb, kw, kbl = jax.random.split(key, 5)
    gamma = 1.0 + 0.1 * jax.random.normal(kg, (C,), jnp.float32)
    beta = 0.1 * jax.random.normal(kb, (C,), jnp.float32)
    mean = jnp.zeros((C,), jnp.float32)                  # BatchNorm1d running stats
    var = jnp.ones((C,), jnp.float32)
    scale = gamma * jax.lax.rsqrt(var + 1e-5)            # eval-mode BN folded affine
    params["bn_scale"] = scale.reshape(1, C)
    params["bn_shift"] = (beta - mean * scale).reshape(1, C)
    params["w_lin"] = 0.1 * jax.random.normal(kw, (C, output_size), jnp.float32)
    params["b_lin"] = (0.1 * jax.random.normal(kbl, (output_size,), jnp.float32)
                       ).reshape(1, output_size)
    return params


# --------------------------- Forward -------------------------------------------

def tcn_forward(params, inputs, orinput=None):
    """wavelet=False branch of TCN.forward.

    inputs: (N, L, C_in) channels-last (== the module's layout right before its
    internal `.permute(0, 2, 1)` feeds Conv1d)."""
    del orinput  # only used by the (unimplemented) wavelet branch
    normalized, o_full = _tcn_pallas(params, inputs.astype(jnp.bfloat16))
    return o_full[0, :], {"orig": normalized, "pos": None, "neg": None}


if __name__ == "__main__":
    key = jax.random.PRNGKey(0)
    N, L, C_in = 2, 16, 4          # batch, input_length, input_channels
    num_channels = [8, 8]          # channel_lst = "8,8"
    kernel_size = 3
    output_size = 5

    kx, ko, kp = jax.random.split(key, 3)
    inputs = jax.random.normal(kx, (N, L, C_in), jnp.float32)
    orinput = jax.random.normal(ko, (N, L, C_in), jnp.float32)  # unused (wavelet=False)
    params = init_tcn_params(kp, C_in, num_channels, kernel_size, output_size)

    o, aux = tcn_forward(params, inputs, orinput)
    jax.block_until_ready((o, aux["orig"]))

    assert o.shape == (output_size,)
    assert aux["orig"].shape == (N, num_channels[-1])
    assert aux["pos"] is None and aux["neg"] is None
    assert bool(jnp.isfinite(o).all()) and bool(jnp.isfinite(aux["orig"]).all())
    print("KERNEL_OK")
</pallas_src>

<mosaic_0001>
module attributes {stable_mosaic.version = 11 : i64} {
  func.func @_tcn_fused_kernel(%arg0: i32, %arg1: memref<2x16x4xbf16, #tpu.memory_space<vmem>>, %arg2: memref<3x4x16xbf16, #tpu.memory_space<vmem>>, %arg3: memref<1x16xf32, #tpu.memory_space<vmem>>, %arg4: memref<3x8x8xbf16, #tpu.memory_space<vmem>>, %arg5: memref<1x8xf32, #tpu.memory_space<vmem>>, %arg6: memref<3x8x8xbf16, #tpu.memory_space<vmem>>, %arg7: memref<1x8xf32, #tpu.memory_space<vmem>>, %arg8: memref<3x8x8xbf16, #tpu.memory_space<vmem>>, %arg9: memref<1x8xf32, #tpu.memory_space<vmem>>, %arg10: memref<1x8xf32, #tpu.memory_space<vmem>>, %arg11: memref<1x8xf32, #tpu.memory_space<vmem>>, %arg12: memref<8x5xf32, #tpu.memory_space<vmem>>, %arg13: memref<1x5xf32, #tpu.memory_space<vmem>>, %arg14: memref<2x8xf32, #tpu.memory_space<vmem>>, %arg15: memref<2x5xf32, #tpu.memory_space<vmem>>) attributes {dimension_semantics = [#tpu.dimension_semantics<parallel>], iteration_bounds = array<i64: 1>, scalar_prefetch = 0 : i64, scratch_operands = 0 : i64, tpu.core_type = #tpu.core_type<tc>, window_params = [{transform_indices = @transform_0, window_bounds = array<i64: 2, 16, 4>}, {pipeline_mode = #tpu.pipeline_mode<synchronous>, transform_indices = @transform_1, window_bounds = array<i64: 3, 4, 16>}, {pipeline_mode = #tpu.pipeline_mode<synchronous>, transform_indices = @transform_2, window_bounds = array<i64: 1, 16>}, {pipeline_mode = #tpu.pipeline_mode<synchronous>, transform_indices = @transform_3, window_bounds = array<i64: 3, 8, 8>}, {pipeline_mode = #tpu.pipeline_mode<synchronous>, transform_indices = @transform_4, window_bounds = array<i64: 1, 8>}, {pipeline_mode = #tpu.pipeline_mode<synchronous>, transform_indices = @transform_5, window_bounds = array<i64: 3, 8, 8>}, {pipeline_mode = #tpu.pipeline_mode<synchronous>, transform_indices = @transform_6, window_bounds = array<i64: 1, 8>}, {pipeline_mode = #tpu.pipeline_mode<synchronous>, transform_indices = @transform_7, window_bounds = array<i64: 3, 8, 8>}, {pipeline_mode = #tpu.pipeline_mode<synchronous>, transform_indices = @transform_8, window_bounds = array<i64: 1, 8>}, {pipeline_mode = #tpu.pipeline_mode<synchronous>, transform_indices = @transform_9, window_bounds = array<i64: 1, 8>}, {pipeline_mode = #tpu.pipeline_mode<synchronous>, transform_indices = @transform_10, window_bounds = array<i64: 1, 8>}, {pipeline_mode = #tpu.pipeline_mode<synchronous>, transform_indices = @transform_11, window_bounds = array<i64: 8, 5>}, {pipeline_mode = #tpu.pipeline_mode<synchronous>, transform_indices = @transform_12, window_bounds = array<i64: 1, 5>}, {transform_indices = @transform_13, window_bounds = array<i64: 2, 8>}, {transform_indices = @transform_14, window_bounds = array<i64: 2, 5>}]} {
    %c0 = arith.constant 0 : index
    %c0_0 = arith.constant 0 : index
    %c0_1 = arith.constant 0 : index
    %0 = vector.load %arg1[%c0, %c0_0, %c0_1] : memref<2x16x4xbf16, #tpu.memory_space<vmem>>, vector<2x16x4xbf16>
    %1 = vector.shape_cast %0 : vector<2x16x4xbf16> to vector<32x4xbf16>
    %c0_2 = arith.constant 0 : index
    %c0_3 = arith.constant 0 : index
    %c0_4 = arith.constant 0 : index
    %2 = vector.load %arg2[%c0_2, %c0_3, %c0_4] : memref<3x4x16xbf16, #tpu.memory_space<vmem>>, vector<1x4x16xbf16>
    %3 = vector.shape_cast %2 : vector<1x4x16xbf16> to vector<4x16xbf16>
    %cst = arith.constant dense<0.000000e+00> : vector<32x16xf32>
    %4 = tpu.matmul %1, %3, %cst {dimension_numbers = #tpu.dot_dimension_numbers<[1], [0], [0], [1], [0, 0, 1, 1], [], []>} : vector<32x4xbf16>, vector<4x16xbf16>, vector<32x16xf32> -> vector<32x16xf32>
    %5 = vector.shape_cast %4 : vector<32x16xf32> to vector<2x16x16xf32>
    %cst_5 = arith.constant 0.000000e+00 : f32
    %6 = vector.broadcast %cst_5 : f32 to vector<2x2x16xf32>
    %7 = vector.extract_strided_slice %5 {offsets = [0, 0, 0], sizes = [2, 14, 16], strides = [1, 1, 1]} : vector<2x16x16xf32> to vector<2x14x16xf32>
    %8 = tpu.concatenate %6, %7 in 1 : vector<2x2x16xf32>, vector<2x14x16xf32> -> vector<2x16x16xf32>
    %9 = vector.shape_cast %8 : vector<2x16x16xf32> to vector<32x16xf32>
    %c1 = arith.constant 1 : index
    %c0_6 = arith.constant 0 : index
    %c0_7 = arith.constant 0 : index
    %10 = vector.load %arg2[%c1, %c0_6, %c0_7] : memref<3x4x16xbf16, #tpu.memory_space<vmem>>, vector<1x4x16xbf16>
    %11 = vector.shape_cast %10 : vector<1x4x16xbf16> to vector<4x16xbf16>
    %cst_8 = arith.constant dense<0.000000e+00> : vector<32x16xf32>
    %12 = tpu.matmul %1, %11, %cst_8 {dimension_numbers = #tpu.dot_dimension_numbers<[1], [0], [0], [1], [0, 0, 1, 1], [], []>} : vector<32x4xbf16>, vector<4x16xbf16>, vector<32x16xf32> -> vector<32x16xf32>
    %13 = vector.shape_cast %12 : vector<32x16xf32> to vector<2x16x16xf32>
    %cst_9 = arith.constant 0.000000e+00 : f32
    %14 = vector.broadcast %cst_9 : f32 to vector<2x1x16xf32>
    %15 = vector.extract_strided_slice %13 {offsets = [0, 0, 0], sizes = [2, 15, 16], strides = [1, 1, 1]} : vector<2x16x16xf32> to vector<2x15x16xf32>
    %16 = tpu.concatenate %14, %15 in 1 : vector<2x1x16xf32>, vector<2x15x16xf32> -> vector<2x16x16xf32>
    %17 = vector.shape_cast %16 : vector<2x16x16xf32> to vector<32x16xf32>
    %18 = arith.addf %9, %17 : vector<32x16xf32>
    %c2 = arith.constant 2 : index
    %c0_10 = arith.constant 0 : index
    %c0_11 = arith.constant 0 : index
    %19 = vector.load %arg2[%c2, %c0_10, %c0_11] : memref<3x4x16xbf16, #tpu.memory_space<vmem>>, vector<1x4x16xbf16>
    %20 = vector.shape_cast %19 : vector<1x4x16xbf16> to vector<4x16xbf16>
    %cst_12 = arith.constant dense<0.000000e+00> : vector<32x16xf32>
    %21 = tpu.matmul %1, %20, %cst_12 {dimension_numbers = #tpu.dot_dimension_numbers<[1], [0], [0], [1], [0, 0, 1, 1], [], []>} : vector<32x4xbf16>, vector<4x16xbf16>, vector<32x16xf32> -> vector<32x16xf32>
    %22 = arith.addf %18, %21 : vector<32x16xf32>
    %c0_13 = arith.constant 0 : index
    %c0_14 = arith.constant 0 : index
    %23 = vector.load %arg3[%c0_13, %c0_14] : memref<1x16xf32, #tpu.memory_space<vmem>>, vector<1x16xf32>
    %24 = vector.broadcast %23 : vector<1x16xf32> to vector<32x16xf32>
    %25 = arith.addf %22, %24 : vector<32x16xf32>
    %26 = vector.extract_strided_slice %25 {offsets = [0, 0], sizes = [32, 8], strides = [1, 1]} : vector<32x16xf32> to vector<32x8xf32>
    %cst_15 = arith.constant 0.000000e+00 : f32
    %27 = vector.broadcast %cst_15 : f32 to vector<32x8xf32>
    %28 = arith.maximumf %26, %27 : vector<32x8xf32>
    %29 = vector.extract_strided_slice %25 {offsets = [0, 8], sizes = [32, 8], strides = [1, 1]} : vector<32x16xf32> to vector<32x8xf32>
    %30 = arith.truncf %28 : vector<32x8xf32> to vector<32x8xbf16>
    %c0_16 = arith.constant 0 : index
    %c0_17 = arith.constant 0 : index
    %c0_18 = arith.constant 0 : index
    %31 = vector.load %arg4[%c0_16, %c0_17, %c0_18] : memref<3x8x8xbf16, #tpu.memory_space<vmem>>, vector<1x8x8xbf16>
    %32 = vector.shape_cast %31 : vector<1x8x8xbf16> to vector<8x8xbf16>
    %cst_19 = arith.constant dense<0.000000e+00> : vector<32x8xf32>
    %33 = tpu.matmul %30, %32, %cst_19 {dimension_numbers = #tpu.dot_dimension_numbers<[1], [0], [0], [1], [0, 0, 1, 1], [], []>} : vector<32x8xbf16>, vector<8x8xbf16>, vector<32x8xf32> -> vector<32x8xf32>
    %34 = vector.shape_cast %33 : vector<32x8xf32> to vector<2x16x8xf32>
    %cst_20 = arith.constant 0.000000e+00 : f32
    %35 = vector.broadcast %cst_20 : f32 to vector<2x2x8xf32>
    %36 = vector.extract_strided_slice %34 {offsets = [0, 0, 0], sizes = [2, 14, 8], strides = [1, 1, 1]} : vector<2x16x8xf32> to vector<2x14x8xf32>
    %37 = tpu.concatenate %35, %36 in 1 : vector<2x2x8xf32>, vector<2x14x8xf32> -> vector<2x16x8xf32>
    %38 = vector.shape_cast %37 : vector<2x16x8xf32> to vector<32x8xf32>
    %c1_21 = arith.constant 1 : index
    %c0_22 = arith.constant 0 : index
    %c0_23 = arith.constant 0 : index
    %39 = vector.load %arg4[%c1_21, %c0_22, %c0_23] : memref<3x8x8xbf16, #tpu.memory_space<vmem>>, vector<1x8x8xbf16>
    %40 = vector.shape_cast %39 : vector<1x8x8xbf16> to vector<8x8xbf16>
    %cst_24 = arith.constant dense<0.000000e+00> : vector<32x8xf32>
    %41 = tpu.matmul %30, %40, %cst_24 {dimension_numbers = #tpu.dot_dimension_numbers<[1], [0], [0], [1], [0, 0, 1, 1], [], []>} : vector<32x8xbf16>, vector<8x8xbf16>, vector<32x8xf32> -> vector<32x8xf32>
    %42 = vector.shape_cast %41 : vector<32x8xf32> to vector<2x16x8xf32>
    %cst_25 = arith.constant 0.000000e+00 : f32
    %43 = vector.broadcast %cst_25 : f32 to vector<2x1x8xf32>
    %44 = vector.extract_strided_slice %42 {offsets = [0, 0, 0], sizes = [2, 15, 8], strides = [1, 1, 1]} : vector<2x16x8xf32> to vector<2x15x8xf32>
    %45 = tpu.concatenate %43, %44 in 1 : vector<2x1x8xf32>, vector<2x15x8xf32> -> vector<2x16x8xf32>
    %46 = vector.shape_cast %45 : vector<2x16x8xf32> to vector<32x8xf32>
    %47 = arith.addf %38, %46 : vector<32x8xf32>
    %c2_26 = arith.constant 2 : index
    %c0_27 = arith.constant 0 : index
    %c0_28 = arith.constant 0 : index
    %48 = vector.load %arg4[%c2_26, %c0_27, %c0_28] : memref<3x8x8xbf16, #tpu.memory_space<vmem>>, vector<1x8x8xbf16>
    %49 = vector.shape_cast %48 : vector<1x8x8xbf16> to vector<8x8xbf16>
    %cst_29 = arith.constant dense<0.000000e+00> : vector<32x8xf32>
    %50 = tpu.matmul %30, %49, %cst_29 {dimension_numbers = #tpu.dot_dimension_numbers<[1], [0], [0], [1], [0, 0, 1, 1], [], []>} : vector<32x8xbf16>, vector<8x8xbf16>, vector<32x8xf32> -> vector<32x8xf32>
    %51 = arith.addf %47, %50 : vector<32x8xf32>
    %c0_30 = arith.constant 0 : index
    %c0_31 = arith.constant 0 : index
    %52 = vector.load %arg5[%c0_30, %c0_31] : memref<1x8xf32, #tpu.memory_space<vmem>>, vector<1x8xf32>
    %53 = vector.broadcast %52 : vector<1x8xf32> to vector<32x8xf32>
    %54 = arith.addf %51, %53 : vector<32x8xf32>
    %cst_32 = arith.constant 0.000000e+00 : f32
    %55 = vector.broadcast %cst_32 : f32 to vector<32x8xf32>
    %56 = arith.maximumf %54, %55 : vector<32x8xf32>
    %57 = arith.addf %56, %29 : vector<32x8xf32>
    %cst_33 = arith.constant 0.000000e+00 : f32
    %58 = vector.broadcast %cst_33 : f32 to vector<32x8xf32>
    %59 = arith.maximumf %57, %58 : vector<32x8xf32>
    %60 = arith.truncf %59 : vector<32x8xf32> to vector<32x8xbf16>
    %61 = vector.shape_cast %60 : vector<32x8xbf16> to vector<2x16x8xbf16>
    %62 = vector.shape_cast %61 : vector<2x16x8xbf16> to vector<32x8xbf16>
    %c0_34 = arith.constant 0 : index
    %c0_35 = arith.constant 0 : index
    %c0_36 = arith.constant 0 : index
    %63 = vector.load %arg6[%c0_34, %c0_35, %c0_36] : memref<3x8x8xbf16, #tpu.memory_space<vmem>>, vector<1x8x8xbf16>
    %64 = vector.shape_cast %63 : vector<1x8x8xbf16> to vector<8x8xbf16>
    %cst_37 = arith.constant dense<0.000000e+00> : vector<32x8xf32>
    %65 = tpu.matmul %62, %64, %cst_37 {dimension_numbers = #tpu.dot_dimension_numbers<[1], [0], [0], [1], [0, 0, 1, 1], [], []>} : vector<32x8xbf16>, vector<8x8xbf16>, vector<32x8xf32> -> vector<32x8xf32>
    %66 = vector.shape_cast %65 : vector<32x8xf32> to vector<2x16x8xf32>
    %cst_38 = arith.constant 0.000000e+00 : f32
    %67 = vector.broadcast %cst_38 : f32 to vector<2x4x8xf32>
    %68 = vector.extract_strided_slice %66 {offsets = [0, 0, 0], sizes = [2, 12, 8], strides = [1, 1, 1]} : vector<2x16x8xf32> to vector<2x12x8xf32>
    %69 = tpu.concatenate %67, %68 in 1 : vector<2x4x8xf32>, vector<2x12x8xf32> -> vector<2x16x8xf32>
    %70 = vector.shape_cast %69 : vector<2x16x8xf32> to vector<32x8xf32>
    %c1_39 = arith.constant 1 : index
    %c0_40 = arith.constant 0 : index
    %c0_41 = arith.constant 0 : index
    %71 = vector.load %arg6[%c1_39, %c0_40, %c0_41] : memref<3x8x8xbf16, #tpu.memory_space<vmem>>, vector<1x8x8xbf16>
    %72 = vector.shape_cast %71 : vector<1x8x8xbf16> to vector<8x8xbf16>
    %cst_42 = arith.constant dense<0.000000e+00> : vector<32x8xf32>
    %73 = tpu.matmul %62, %72, %cst_42 {dimension_numbers = #tpu.dot_dimension_numbers<[1], [0], [0], [1], [0, 0, 1, 1], [], []>} : vector<32x8xbf16>, vector<8x8xbf16>, vector<32x8xf32> -> vector<32x8xf32>
    %74 = vector.shape_cast %73 : vector<32x8xf32> to vector<2x16x8xf32>
    %cst_43 = arith.constant 0.000000e+00 : f32
    %75 = vector.broadcast %cst_43 : f32 to vector<2x2x8xf32>
    %76 = vector.extract_strided_slice %74 {offsets = [0, 0, 0], sizes = [2, 14, 8], strides = [1, 1, 1]} : vector<2x16x8xf32> to vector<2x14x8xf32>
    %77 = tpu.concatenate %75, %76 in 1 : vector<2x2x8xf32>, vector<2x14x8xf32> -> vector<2x16x8xf32>
    %78 = vector.shape_cast %77 : vector<2x16x8xf32> to vector<32x8xf32>
    %79 = arith.addf %70, %78 : vector<32x8xf32>
    %c2_44 = arith.constant 2 : index
    %c0_45 = arith.constant 0 : index
    %c0_46 = arith.constant 0 : index
    %80 = vector.load %arg6[%c2_44, %c0_45, %c0_46] : memref<3x8x8xbf16, #tpu.memory_space<vmem>>, vector<1x8x8xbf16>
    %81 = vector.shape_cast %80 : vector<1x8x8xbf16> to vector<8x8xbf16>
    %cst_47 = arith.constant dense<0.000000e+00> : vector<32x8xf32>
    %82 = tpu.matmul %62, %81, %cst_47 {dimension_numbers = #tpu.dot_dimension_numbers<[1], [0], [0], [1], [0, 0, 1, 1], [], []>} : vector<32x8xbf16>, vector<8x8xbf16>, vector<32x8xf32> -> vector<32x8xf32>
    %83 = arith.addf %79, %82 : vector<32x8xf32>
    %c0_48 = arith.constant 0 : index
    %c0_49 = arith.constant 0 : index
    %84 = vector.load %arg7[%c0_48, %c0_49] : memref<1x8xf32, #tpu.memory_space<vmem>>, vector<1x8xf32>
    %85 = vector.broadcast %84 : vector<1x8xf32> to vector<32x8xf32>
    %86 = arith.addf %83, %85 : vector<32x8xf32>
    %cst_50 = arith.constant 0.000000e+00 : f32
    %87 = vector.broadcast %cst_50 : f32 to vector<32x8xf32>
    %88 = arith.maximumf %86, %87 : vector<32x8xf32>
    %89 = arith.truncf %88 : vector<32x8xf32> to vector<32x8xbf16>
    %c0_51 = arith.constant 0 : index
    %c0_52 = arith.constant 0 : index
    %c0_53 = arith.constant 0 : index
    %90 = vector.load %arg8[%c0_51, %c0_52, %c0_53] : memref<3x8x8xbf16, #tpu.memory_space<vmem>>, vector<1x8x8xbf16>
    %91 = vector.shape_cast %90 : vector<1x8x8xbf16> to vector<8x8xbf16>
    %cst_54 = arith.constant dense<0.000000e+00> : vector<32x8xf32>
    %92 = tpu.matmul %89, %91, %cst_54 {dimension_numbers = #tpu.dot_dimension_numbers<[1], [0], [0], [1], [0, 0, 1, 1], [], []>} : vector<32x8xbf16>, vector<8x8xbf16>, vector<32x8xf32> -> vector<32x8xf32>
    %93 = vector.shape_cast %92 : vector<32x8xf32> to vector<2x16x8xf32>
    %cst_55 = arith.constant 0.000000e+00 : f32
    %94 = vector.broadcast %cst_55 : f32 to vector<2x4x8xf32>
    %95 = vector.extract_strided_slice %93 {offsets = [0, 0, 0], sizes = [2, 12, 8], strides = [1, 1, 1]} : vector<2x16x8xf32> to vector<2x12x8xf32>
    %96 = tpu.concatenate %94, %95 in 1 : vector<2x4x8xf32>, vector<2x12x8xf32> -> vector<2x16x8xf32>
    %97 = vector.shape_cast %96 : vector<2x16x8xf32> to vector<32x8xf32>
    %c1_56 = arith.constant 1 : index
    %c0_57 = arith.constant 0 : index
    %c0_58 = arith.constant 0 : index
    %98 = vector.load %arg8[%c1_56, %c0_57, %c0_58] : memref<3x8x8xbf16, #tpu.memory_space<vmem>>, vector<1x8x8xbf16>
    %99 = vector.shape_cast %98 : vector<1x8x8xbf16> to vector<8x8xbf16>
    %cst_59 = arith.constant dense<0.000000e+00> : vector<32x8xf32>
    %100 = tpu.matmul %89, %99, %cst_59 {dimension_numbers = #tpu.dot_dimension_numbers<[1], [0], [0], [1], [0, 0, 1, 1], [], []>} : vector<32x8xbf16>, vector<8x8xbf16>, vector<32x8xf32> -> vector<32x8xf32>
    %101 = vector.shape_cast %100 : vector<32x8xf32> to vector<2x16x8xf32>
    %cst_60 = arith.constant 0.000000e+00 : f32
    %102 = vector.broadcast %cst_60 : f32 to vector<2x2x8xf32>
    %103 = vector.extract_strided_slice %101 {offsets = [0, 0, 0], sizes = [2, 14, 8], strides = [1, 1, 1]} : vector<2x16x8xf32> to vector<2x14x8xf32>
    %104 = tpu.concatenate %102, %103 in 1 : vector<2x2x8xf32>, vector<2x14x8xf32> -> vector<2x16x8xf32>
    %105 = vector.shape_cast %104 : vector<2x16x8xf32> to vector<32x8xf32>
    %106 = arith.addf %97, %105 : vector<32x8xf32>
    %c2_61 = arith.constant 2 : index
    %c0_62 = arith.constant 0 : index
    %c0_63 = arith.constant 0 : index
    %107 = vector.load %arg8[%c2_61, %c0_62, %c0_63] : memref<3x8x8xbf16, #tpu.memory_space<vmem>>, vector<1x8x8xbf16>
    %108 = vector.shape_cast %107 : vector<1x8x8xbf16> to vector<8x8xbf16>
    %cst_64 = arith.constant dense<0.000000e+00> : vector<32x8xf32>
    %109 = tpu.matmul %89, %108, %cst_64 {dimension_numbers = #tpu.dot_dimension_numbers<[1], [0], [0], [1], [0, 0, 1, 1], [], []>} : vector<32x8xbf16>, vector<8x8xbf16>, vector<32x8xf32> -> vector<32x8xf32>
    %110 = arith.addf %106, %109 : vector<32x8xf32>
    %c0_65 = arith.constant 0 : index
    %c0_66 = arith.constant 0 : index
    %111 = vector.load %arg9[%c0_65, %c0_66] : memref<1x8xf32, #tpu.memory_space<vmem>>, vector<1x8xf32>
    %112 = vector.broadcast %111 : vector<1x8xf32> to vector<32x8xf32>
    %113 = arith.addf %110, %112 : vector<32x8xf32>
    %cst_67 = arith.constant 0.000000e+00 : f32
    %114 = vector.broadcast %cst_67 : f32 to vector<32x8xf32>
    %115 = arith.maximumf %113, %114 : vector<32x8xf32>
    %116 = arith.addf %115, %59 : vector<32x8xf32>
    %cst_68 = arith.constant 0.000000e+00 : f32
    %117 = vector.broadcast %cst_68 : f32 to vector<32x8xf32>
    %118 = arith.maximumf %116, %117 : vector<32x8xf32>
    %119 = vector.shape_cast %118 : vector<32x8xf32> to vector<2x16x8xf32>
    %120 = vector.extract_strided_slice %119 {offsets = [0, 15, 0], sizes = [2, 1, 8], strides = [1, 1, 1]} : vector<2x16x8xf32> to vector<2x1x8xf32>
    %121 = vector.shape_cast %120 : vector<2x1x8xf32> to vector<2x8xf32>
    %c0_69 = arith.constant 0 : index
    %c0_70 = arith.constant 0 : index
    %122 = vector.load %arg10[%c0_69, %c0_70] : memref<1x8xf32, #tpu.memory_space<vmem>>, vector<1x8xf32>
    %123 = vector.broadcast %122 : vector<1x8xf32> to vector<2x8xf32>
    %124 = arith.mulf %121, %123 : vector<2x8xf32>
    %c0_71 = arith.constant 0 : index
    %c0_72 = arith.constant 0 : index
    %125 = vector.load %arg11[%c0_71, %c0_72] : memref<1x8xf32, #tpu.memory_space<vmem>>, vector<1x8xf32>
    %126 = vector.broadcast %125 : vector<1x8xf32> to vector<2x8xf32>
    %127 = arith.addf %124, %126 : vector<2x8xf32>
    %c0_73 = arith.constant 0 : index
    %c0_74 = arith.constant 0 : index
    %128 = vector.load %arg14[%c0_73, %c0_74] : memref<2x8xf32, #tpu.memory_space<vmem>>, vector<2x8xf32>
    tpu.vector_store %arg14[%c0_73, %c0_74], %127 {strides = array<i32>} : memref<2x8xf32, #tpu.memory_space<vmem>>, vector<2x8xf32>,
    %c0_75 = arith.constant 0 : index
    %c0_76 = arith.constant 0 : index
    %129 = vector.load %arg12[%c0_75, %c0_76] : memref<8x5xf32, #tpu.memory_space<vmem>>, vector<8x5xf32>
    %cst_77 = arith.constant dense<0.000000e+00> : vector<2x5xf32>
    %130 = tpu.matmul %127, %129, %cst_77 {dimension_numbers = #tpu.dot_dimension_numbers<[1], [0], [0], [1], [0, 0, 1, 1], [], []>} : vector<2x8xf32>, vector<8x5xf32>, vector<2x5xf32> -> vector<2x5xf32>
    %c0_78 = arith.constant 0 : index
    %c0_79 = arith.constant 0 : index
    %131 = vector.load %arg13[%c0_78, %c0_79] : memref<1x5xf32, #tpu.memory_space<vmem>>, vector<1x5xf32>
    %132 = vector.broadcast %131 : vector<1x5xf32> to vector<2x5xf32>
    %133 = arith.addf %130, %132 : vector<2x5xf32>
    %c0_80 = arith.constant 0 : index
    %c0_81 = arith.constant 0 : index
    %134 = vector.load %arg15[%c0_80, %c0_81] : memref<2x5xf32, #tpu.memory_space<vmem>>, vector<2x5xf32>
    tpu.vector_store %arg15[%c0_80, %c0_81], %133 {strides = array<i32>} : memref<2x5xf32, #tpu.memory_space<vmem>>, vector<2x5xf32>,
    return
  }
  func.func @transform_0(%arg0: i32) -> (i32, i32, i32) {
    %c0_i32 = arith.constant 0 : i32
    %c0_i32_0 = arith.constant 0 : i32
    %c0_i32_1 = arith.constant 0 : i32
    return %arg0, %c0_i32, %c0_i32_0 : i32, i32, i32
  }
  func.func @transform_1(%arg0: i32) -> (i32, i32, i32) {
    %c0_i32 = arith.constant 0 : i32
    %c0_i32_0 = arith.constant 0 : i32
    %c0_i32_1 = arith.constant 0 : i32
    %c0_i32_2 = arith.constant 0 : i32
    return %c0_i32, %c0_i32_0, %c0_i32_1 : i32, i32, i32
  }
  func.func @transform_2(%arg0: i32) -> (i32, i32) {
    %c0_i32 = arith.constant 0 : i32
    %c0_i32_0 = arith.constant 0 : i32
    %c0_i32_1 = arith.constant 0 : i32
    return %c0_i32, %c0_i32_0 : i32, i32
  }
  func.func @transform_3(%arg0: i32) -> (i32, i32, i32) {
    %c0_i32 = arith.constant 0 : i32
    %c0_i32_0 = arith.constant 0 : i32
    %c0_i32_1 = arith.constant 0 : i32
    %c0_i32_2 = arith.constant 0 : i32
    return %c0_i32, %c0_i32_0, %c0_i32_1 : i32, i32, i32
  }
  func.func @transform_4(%arg0: i32) -> (i32, i32) {
    %c0_i32 = arith.constant 0 : i32
    %c0_i32_0 = arith.constant 0 : i32
    %c0_i32_1 = arith.constant 0 : i32
    return %c0_i32, %c0_i32_0 : i32, i32
  }
  func.func @transform_5(%arg0: i32) -> (i32, i32, i32) {
    %c0_i32 = arith.constant 0 : i32
    %c0_i32_0 = arith.constant 0 : i32
    %c0_i32_1 = arith.constant 0 : i32
    %c0_i32_2 = arith.constant 0 : i32
    return %c0_i32, %c0_i32_0, %c0_i32_1 : i32, i32, i32
  }
  func.func @transform_6(%arg0: i32) -> (i32, i32) {
    %c0_i32 = arith.constant 0 : i32
    %c0_i32_0 = arith.constant 0 : i32
    %c0_i32_1 = arith.constant 0 : i32
    return %c0_i32, %c0_i32_0 : i32, i32
  }
  func.func @transform_7(%arg0: i32) -> (i32, i32, i32) {
    %c0_i32 = arith.constant 0 : i32
    %c0_i32_0 = arith.constant 0 : i32
    %c0_i32_1 = arith.constant 0 : i32
    %c0_i32_2 = arith.constant 0 : i32
    return %c0_i32, %c0_i32_0, %c0_i32_1 : i32, i32, i32
  }
  func.func @transform_8(%arg0: i32) -> (i32, i32) {
    %c0_i32 = arith.constant 0 : i32
    %c0_i32_0 = arith.constant 0 : i32
    %c0_i32_1 = arith.constant 0 : i32
    return %c0_i32, %c0_i32_0 : i32, i32
  }
  func.func @transform_9(%arg0: i32) -> (i32, i32) {
    %c0_i32 = arith.constant 0 : i32
    %c0_i32_0 = arith.constant 0 : i32
    %c0_i32_1 = arith.constant 0 : i32
    return %c0_i32, %c0_i32_0 : i32, i32
  }
  func.func @transform_10(%arg0: i32) -> (i32, i32) {
    %c0_i32 = arith.constant 0 : i32
    %c0_i32_0 = arith.constant 0 : i32
    %c0_i32_1 = arith.constant 0 : i32
    return %c0_i32, %c0_i32_0 : i32, i32
  }
  func.func @transform_11(%arg0: i32) -> (i32, i32) {
    %c0_i32 = arith.constant 0 : i32
    %c0_i32_0 = arith.constant 0 : i32
    %c0_i32_1 = arith.constant 0 : i32
    return %c0_i32, %c0_i32_0 : i32, i32
  }
  func.func @transform_12(%arg0: i32) -> (i32, i32) {
    %c0_i32 = arith.constant 0 : i32
    %c0_i32_0 = arith.constant 0 : i32
    %c0_i32_1 = arith.constant 0 : i32
    return %c0_i32, %c0_i32_0 : i32, i32
  }
  func.func @transform_13(%arg0: i32) -> (i32, i32) {
    %c0_i32 = arith.constant 0 : i32
    %c0_i32_0 = arith.constant 0 : i32
    return %arg0, %c0_i32 : i32, i32
  }
  func.func @transform_14(%arg0: i32) -> (i32, i32) {
    %c0_i32 = arith.constant 0 : i32
    %c0_i32_0 = arith.constant 0 : i32
    return %arg0, %c0_i32 : i32, i32
  }
}

</mosaic_0001>

<llo_original>
// kernel: tpu_custom_call.1
$region0: #{tpu_custom_call.1}
  #allocation0 [shape = 'u32[]', space=smem, size = 0x4, offset = 0x4, fixed_abs, tag = 'smem constant byte address 0x4 - core index']
  #allocation1 [shape = 'u32[144,128]{1,0:T(1,128)}', space=vmem, size = 0x12000, scoped, tag = 'internal scratch']
  %s0 = inlined_call_operand.vmem [shape: bf16[2,16,4], index: 0, kind: input, shape index: {}]
  %s1 = inlined_call_operand.hbm [shape: bf16[3,4,16], index: 1, kind: input, shape index: {}]
  %s2 = inlined_call_operand.hbm [shape: f32[1,16], index: 2, kind: input, shape index: {}]
  %s3 = inlined_call_operand.vmem [shape: bf16[3,8,8], index: 3, kind: input, shape index: {}]
  %s4 = inlined_call_operand.hbm [shape: f32[1,8], index: 4, kind: input, shape index: {}]
  %s5 = inlined_call_operand.vmem [shape: bf16[3,8,8], index: 5, kind: input, shape index: {}]
  %s6 = inlined_call_operand.hbm [shape: f32[1,8], index: 6, kind: input, shape index: {}]
  %s7 = inlined_call_operand.hbm [shape: bf16[3,8,8], index: 7, kind: input, shape index: {}]
  %s8 = inlined_call_operand.vmem [shape: f32[1,8], index: 8, kind: input, shape index: {}]
  %s9 = inlined_call_operand.vmem [shape: f32[1,8], index: 9, kind: input, shape index: {}]
  %s10 = inlined_call_operand.vmem [shape: f32[1,8], index: 10, kind: input, shape index: {}]
  %s11 = inlined_call_operand.vmem [shape: f32[8,5], index: 11, kind: input, shape index: {}]
  %s12 = inlined_call_operand.vmem [shape: f32[1,5], index: 12, kind: input, shape index: {}]
  %s13 = inlined_call_operand.hbm [shape: f32[2,8], index: 13, kind: output, shape index: {0}]
  %s14 = inlined_call_operand.hbm [shape: f32[2,5], index: 14, kind: output, shape index: {1}]
  %15 = xla_tuple %s13, %s14
  %s16 = sld [smem:[#allocation0]]
  $region90: #{tpu_custom_call.1} parent=0
    _
  %s18 = ssub.s32 1, %s16
  %s19 = scalar_select 0, %s18, %s16
  $region1: #{tpu_custom_call.1} parent=0
    #allocation2 [shape = 'u8[3072]{0}', space=vmem, size = 0xc00, scoped, tag = 'input window, operand 1, single buffered']
    #allocation3 [shape = 's32[1]{0}', space=sflag, size = 0x4, scoped, tag = 'scoped memory for tpu_custom_call.1']
    #allocation4 [shape = 's32[1]{0}', space=sflag, size = 0x4, scoped, tag = 'scoped memory for tpu_custom_call.1']
    #allocation5 [shape = 'u8[512]{0}', space=vmem, size = 0x400, scoped, tag = 'input window, operand 2, single buffered']
    #allocation6 [shape = 's32[1]{0}', space=sflag, size = 0x4, scoped, tag = 'scoped memory for tpu_custom_call.1']
    #allocation7 [shape = 'u8[512]{0}', space=vmem, size = 0x400, scoped, tag = 'input window, operand 4, single buffered']
    #allocation8 [shape = 'u8[512]{0}', space=vmem, size = 0x400, scoped, tag = 'input window, operand 6, single buffered']
    #allocation9 [shape = 's32[1]{0}', space=sflag, size = 0x4, scoped, tag = 'scoped memory for tpu_custom_call.1']
    #allocation10 [shape = 'u8[6144]{0}', space=vmem, size = 0x1800, scoped, tag = 'input window, operand 7, single buffered']
    #allocation11 [shape = 'u8[1024]{0}', space=vmem, size = 0x400, scoped, tag = 'output window, operand 0, single buffered']
    #allocation12 [shape = 'u8[1024]{0}', space=vmem, size = 0x400, scoped, tag = 'output window, operand 1, single buffered']
    #allocation13 [shape = 's32[1]{0}', space=sflag, size = 0x4, scoped, tag = 'scoped memory for tpu_custom_call.1']
    %20 = vsyncpa [#allocation3], 0
    %21 = vsyncpa [#allocation6], 0
    %22 = vsyncpa [#allocation9], 0
    %23 = vsyncpa [#allocation4], 0
    %24 = vsyncpa [#allocation13], 0
    // Predicated region
    $region2: #{tpu_custom_call.1} parent=1 // pred_check
      _
    $region3: #{tpu_custom_call.1} parent=1 // pred_check_branch
      %26 = sbr.rel (0) target = $region5
    $region4: #{tpu_custom_call.1} parent=1 // pred_region
      _
    $region5: #{tpu_custom_call.1} parent=1 // pred_fallthru
      _
    // Predicated region
    $region6: #{tpu_custom_call.1} parent=1 // pred_check
      _
    $region7: #{tpu_custom_call.1} parent=1 // pred_check_branch
      %28 = sbr.rel (0) target = $region9
    $region8: #{tpu_custom_call.1} parent=1 // pred_region
      %s30 = ssub.s32 96, 96
      %31 = vsyncadd [#allocation3], %s30
      %s32 = sshll.u32 [#allocation2], 4
      %s33 = int_to_ptr.vmem [resolvable:$true] %s32
      %38 = dma.hbm_to_vmem [thread:$0]  %s1, 96, %s33, [#allocation3], 32, 32, 2
    $region9: #{tpu_custom_call.1} parent=1 // pred_fallthru
      _
    // Predicated region
    $region10: #{tpu_custom_call.1} parent=1 // pred_check
      _
    $region11: #{tpu_custom_call.1} parent=1 // pred_check_branch
      %40 = sbr.rel (0) target = $region13
    $region12: #{tpu_custom_call.1} parent=1 // pred_region
      %s42 = ssub.s32 16, 16
      %43 = vsyncadd [#allocation6], %s42
      %s45 = sshll.u32 [#allocation5], 4
      %s46 = int_to_ptr.vmem [resolvable:$true] %s45
      %48 = dma.hbm_to_vmem [thread:$0]  %s2, 16, %s46, [#allocation6]
    $region13: #{tpu_custom_call.1} parent=1 // pred_fallthru
      _
    // Predicated region
    $region14: #{tpu_custom_call.1} parent=1 // pred_check
      _
    $region15: #{tpu_custom_call.1} parent=1 // pred_check_branch
      %50 = sbr.rel (0) target = $region17
    $region16: #{tpu_custom_call.1} parent=1 // pred_region
      _
    $region17: #{tpu_custom_call.1} parent=1 // pred_fallthru
      _
    // Predicated region
    $region18: #{tpu_custom_call.1} parent=1 // pred_check
      _
    $region19: #{tpu_custom_call.1} parent=1 // pred_check_branch
      %52 = sbr.rel (0) target = $region21
    $region20: #{tpu_custom_call.1} parent=1 // pred_region
      %s54 = ssub.s32 16, 16
      %55 = vsyncadd [#allocation6], %s54
      %s57 = sshll.u32 [#allocation7], 4
      %s58 = int_to_ptr.vmem [resolvable:$true] %s57
      %60 = dma.hbm_to_vmem [thread:$0]  %s4, 16, %s58, [#allocation6]
    $region21: #{tpu_custom_call.1} parent=1 // pred_fallthru
      _
    // Predicated region
    $region22: #{tpu_custom_call.1} parent=1 // pred_check
      _
    $region23: #{tpu_custom_call.1} parent=1 // pred_check_branch
      %62 = sbr.rel (0) target = $region25
    $region24: #{tpu_custom_call.1} parent=1 // pred_region
      _
    $region25: #{tpu_custom_call.1} parent=1 // pred_fallthru
      _
    // Predicated region
    $region26: #{tpu_custom_call.1} parent=1 // pred_check
      _
    $region27: #{tpu_custom_call.1} parent=1 // pred_check_branch
      %64 = sbr.rel (0) target = $region29
    $region28: #{tpu_custom_call.1} parent=1 // pred_region
      %s66 = ssub.s32 16, 16
      %67 = vsyncadd [#allocation9], %s66
      %s69 = sshll.u32 [#allocation8], 4
      %s70 = int_to_ptr.vmem [resolvable:$true] %s69
      %72 = dma.hbm_to_vmem [thread:$0]  %s6, 16, %s70, [#allocation9]
    $region29: #{tpu_custom_call.1} parent=1 // pred_fallthru
      _
    // Predicated region
    $region30: #{tpu_custom_call.1} parent=1 // pred_check
      _
    $region31: #{tpu_custom_call.1} parent=1 // pred_check_branch
      %74 = sbr.rel (0) target = $region33
    $region32: #{tpu_custom_call.1} parent=1 // pred_region
      %s76 = ssub.s32 192, 192
      %77 = vsyncadd [#allocation9], %s76
      %s78 = sshll.u32 [#allocation10], 4
      %s79 = int_to_ptr.vmem [resolvable:$true] %s78
      %84 = dma.hbm_to_vmem [thread:$0]  %s7, 192, %s79, [#allocation9], 64, 64, 4
    $region33: #{tpu_custom_call.1} parent=1 // pred_fallthru
      _
    // Predicated region
    $region34: #{tpu_custom_call.1} parent=1 // pred_check
      _
    $region35: #{tpu_custom_call.1} parent=1 // pred_check_branch
      %86 = sbr.rel (0) target = $region37
    $region36: #{tpu_custom_call.1} parent=1 // pred_region
      _
    $region37: #{tpu_custom_call.1} parent=1 // pred_fallthru
      _
    // Predicated region
    $region38: #{tpu_custom_call.1} parent=1 // pred_check
      _
    $region39: #{tpu_custom_call.1} parent=1 // pred_check_branch
      %88 = sbr.rel (0) target = $region41
    $region40: #{tpu_custom_call.1} parent=1 // pred_region
      _
    $region41: #{tpu_custom_call.1} parent=1 // pred_fallthru
      _
    // Predicated region
    $region42: #{tpu_custom_call.1} parent=1 // pred_check
      _
    $region43: #{tpu_custom_call.1} parent=1 // pred_check_branch
      %90 = sbr.rel (0) target = $region45
    $region44: #{tpu_custom_call.1} parent=1 // pred_region
      _
    $region45: #{tpu_custom_call.1} parent=1 // pred_fallthru
      _
    // Predicated region
    $region46: #{tpu_custom_call.1} parent=1 // pred_check
      _
    $region47: #{tpu_custom_call.1} parent=1 // pred_check_branch
      %92 = sbr.rel (0) target = $region49
    $region48: #{tpu_custom_call.1} parent=1 // pred_region
      _
    $region49: #{tpu_custom_call.1} parent=1 // pred_fallthru
      _
    // Predicated region
    $region50: #{tpu_custom_call.1} parent=1 // pred_check
      _
    $region51: #{tpu_custom_call.1} parent=1 // pred_check_branch
      %94 = sbr.rel (0) target = $region53
    $region52: #{tpu_custom_call.1} parent=1 // pred_region
      _
    $region53: #{tpu_custom_call.1} parent=1 // pred_fallthru
      _
    // Predicated region
    $region54: #{tpu_custom_call.1} parent=1 // pred_check
      _
    $region55: #{tpu_custom_call.1} parent=1 // pred_check_branch
      %96 = sbr.rel (0) target = $region57
    $region56: #{tpu_custom_call.1} parent=1 // pred_region
      %97 = dma.done [#allocation3], 96
    $region57: #{tpu_custom_call.1} parent=1 // pred_fallthru
      _
    // Predicated region
    $region58: #{tpu_custom_call.1} parent=1 // pred_check
      _
    $region59: #{tpu_custom_call.1} parent=1 // pred_check_branch
      %99 = sbr.rel (0) target = $region61
    $region60: #{tpu_custom_call.1} parent=1 // pred_region
      %100 = dma.done [#allocation6], 16
    $region61: #{tpu_custom_call.1} parent=1 // pred_fallthru
      _
    // Predicated region
    $region62: #{tpu_custom_call.1} parent=1 // pred_check
      _
    $region63: #{tpu_custom_call.1} parent=1 // pred_check_branch
      %102 = sbr.rel (0) target = $region65
    $region64: #{tpu_custom_call.1} parent=1 // pred_region
      %103 = dma.done [#allocation6], 16
    $region65: #{tpu_custom_call.1} parent=1 // pred_fallthru
      _
    // Predicated region
    $region66: #{tpu_custom_call.1} parent=1 // pred_check
      _
    $region67: #{tpu_custom_call.1} parent=1 // pred_check_branch
      %105 = sbr.rel (0) target = $region69
    $region68: #{tpu_custom_call.1} parent=1 // pred_region
      %106 = dma.done [#allocation9], 16
    $region69: #{tpu_custom_call.1} parent=1 // pred_fallthru
      _
    // Predicated region
    $region70: #{tpu_custom_call.1} parent=1 // pred_check
      _
    $region71: #{tpu_custom_call.1} parent=1 // pred_check_branch
      %108 = sbr.rel (0) target = $region73
    $region72: #{tpu_custom_call.1} parent=1 // pred_region
      %109 = dma.done [#allocation9], 192
    $region73: #{tpu_custom_call.1} parent=1 // pred_fallthru
      _
    %v111 = vld [vmem:[%s0] sm:$0xf]
    %v112 = vld [vmem:[%s0 + $0x4] sm:$0xf]
    %v113 = vld [vmem:[%s0 + $0x8] sm:$0xf]
    %v114 = vld [vmem:[%s0 + $0xc] sm:$0xf]
    %v115 = vld [vmem:[#allocation2] sm:$0x3]
    %v120 = vunpack.c.l.b16 %v111
    %v121 = vunpack.c.l.b16 %v112
    %v122 = vunpack.c.l.b16 %v113
    %v123 = vunpack.c.l.b16 %v114
    %v124 = vpack.c.b16 %v121, %v120
    %v125 = vpack.c.b16 %v123, %v122
    %vm126 = vcmask 31744
    %v128 = vsel %vm126, %v124, 0
    %v131 = vsel %vm126, %v125, 0
    %vm133 = vcmask 1041408
    %v135 = vsel %vm133, %v115, 0
    %137 = vmatprep.subr.bf16.mxu0 0
    %138 = vmatpush1.bf16.msra.mxu0 0
    %139 = vmatprep.subr.bf16.mxu0 0
    %140 = vmatpush1.bf16.msra.mxu0 0
    %141 = vmatprep.subr.bf16.mxu0 0
    %142 = vmatpush1.bf16.msra.mxu0 0
    %143 = vmatprep.subr.bf16.mxu0 0
    %144 = vmatpush1.bf16.msra.mxu0 0
    %145 = vmatprep.subr.bf16.mxu0 0
    %146 = vmatpush1.bf16.msra.mxu0 0
    %147 = vmatprep.subr.bf16.mxu0 0
    %148 = vmatpush1.bf16.msra.mxu0 0
    %149 = vmatprep.subr.bf16.mxu0 0
    %150 = vmatpush1.bf16.msra.mxu0 0
    %151 = vmatprep.subr.bf16.mxu0 0
    %152 = vmatpush1.bf16.msra.mxu0 %v135
    %153 = vmatprep.subr.bf16.mxu0 0
    %154 = vmatpush2.bf16.msra.mxu0 0
    %155 = vmatprep.subr.bf16.mxu0 0
    %156 = vmatpush2.bf16.msra.mxu0 0
    %157 = vmatprep.subr.bf16.mxu0 0
    %158 = vmatpush2.bf16.msra.mxu0 0
    %159 = vmatprep.subr.bf16.mxu0 0
    %160 = vmatpush2.bf16.msra.mxu0 0
    %161 = vmatprep.subr.bf16.mxu0 0
    %162 = vmatpush2.bf16.msra.mxu0 0
    %163 = vmatprep.subr.bf16.mxu0 0
    %164 = vmatpush2.bf16.msra.mxu0 0
    %165 = vmatprep.subr.bf16.mxu0 0
    %166 = vmatpush2.bf16.msra.mxu0 0
    %167 = vmatprep.subr.bf16.mxu0 0
    %168 = vmatpush2.bf16.msra.mxu0 0
    %169 = vmatprep.mubr.bf16.mxu0 0
    %170 = vmatmul.mubr.bf16.gmra.mxu0 %v128
    %v171 = vpop.f32.mrf.mxu0
    %v172 = vadd.f32 0.0, %v171
    %v173 = vpop.f32.mrf.mxu0
    %v174 = vpop.f32.mrf.mxu0
    %v175 = vadd.f32 0.0, %v174
    %v176 = vpop.f32.mrf.mxu0
    %177 = vmatprep.mubr.bf16.mxu0 0
    %178 = vmatmul.mubr.bf16.gmra.mxu0 %v131
    %v179 = vpop.f32.mrf.mxu0
    %v180 = vadd.f32 0.0, %v179
    %v181 = vpop.f32.mrf.mxu0
    %v182 = vpop.f32.mrf.mxu0
    %v183 = vadd.f32 0.0, %v182
    %v184 = vpop.f32.mrf.mxu0
    %185 = vdwg.mxu0
    %v190 = vrot.slane %v172, 6
    %v191 = vrot.slane %v175, 6
    %v192 = vsel %vm133, %v190, %v191
    %v193 = vrot.slane %v180, 6
    %v194 = vrot.slane %v183, 6
    %v195 = vsel %vm133, %v193, %v194
    %v200 = vsel %vm133, 0.0, %v190
    %v201 = vsel %vm133, 0.0, %v193
    %s202 = scalar_lea.vmem [#allocation2], 2
    %v203 = vld [vmem:[%s202] sm:$0x3]
    %v205 = vsel %vm133, %v203, 0
    %207 = vmatprep.subr.bf16.mxu0 0
    %208 = vmatpush1.bf16.msra.mxu0 0
    %209 = vmatprep.subr.bf16.mxu0 0
    %210 = vmatpush1.bf16.msra.mxu0 0
    %211 = vmatprep.subr.bf16.mxu0 0
    %212 = vmatpush1.bf16.msra.mxu0 0
    %213 = vmatprep.subr.bf16.mxu0 0
    %214 = vmatpush1.bf16.msra.mxu0 0
    %215 = vmatprep.subr.bf16.mxu0 0
    %216 = vmatpush1.bf16.msra.mxu0 0
    %217 = vmatprep.subr.bf16.mxu0 0
    %218 = vmatpush1.bf16.msra.mxu0 0
    %219 = vmatprep.subr.bf16.mxu0 0
    %220 = vmatpush1.bf16.msra.mxu0 0
    %221 = vmatprep.subr.bf16.mxu0 0
    %222 = vmatpush1.bf16.msra.mxu0 %v205
    %223 = vmatprep.subr.bf16.mxu0 0
    %224 = vmatpush2.bf16.msra.mxu0 0
    %225 = vmatprep.subr.bf16.mxu0 0
    %226 = vmatpush2.bf16.msra.mxu0 0
    %227 = vmatprep.subr.bf16.mxu0 0
    %228 = vmatpush2.bf16.msra.mxu0 0
    %229 = vmatprep.subr.bf16.mxu0 0
    %230 = vmatpush2.bf16.msra.mxu0 0
    %231 = vmatprep.subr.bf16.mxu0 0
    %232 = vmatpush2.bf16.msra.mxu0 0
    %233 = vmatprep.subr.bf16.mxu0 0
    %234 = vmatpush2.bf16.msra.mxu0 0
    %235 = vmatprep.subr.bf16.mxu0 0
    %236 = vmatpush2.bf16.msra.mxu0 0
    %237 = vmatprep.subr.bf16.mxu0 0
    %238 = vmatpush2.bf16.msra.mxu0 0
    %239 = vmatprep.mubr.bf16.mxu0 0
    %240 = vmatmul.mubr.bf16.gmra.mxu0 %v128
    %v241 = vpop.f32.mrf.mxu0
    %v242 = vadd.f32 0.0, %v241
    %v243 = vpop.f32.mrf.mxu0
    %v244 = vpop.f32.mrf.mxu0
    %v245 = vadd.f32 0.0, %v244
    %v246 = vpop.f32.mrf.mxu0
    %247 = vmatprep.mubr.bf16.mxu0 0
    %248 = vmatmul.mubr.bf16.gmra.mxu0 %v131
    %v249 = vpop.f32.mrf.mxu0
    %v250 = vadd.f32 0.0, %v249
    %v251 = vpop.f32.mrf.mxu0
    %v252 = vpop.f32.mrf.mxu0
    %v253 = vadd.f32 0.0, %v252
    %v254 = vpop.f32.mrf.mxu0
    %255 = vdwg.mxu0
    %vm260 = vcmask 1040384
    %v261 = vrot.slane %v242, 7
    %v262 = vrot.slane %v245, 7
    %v263 = vsel %vm260, %v261, %v262
    %v264 = vrot.slane %v250, 7
    %v265 = vrot.slane %v253, 7
    %v266 = vsel %vm260, %v264, %v265
    %v271 = vsel %vm260, 0.0, %v261
    %v272 = vsel %vm260, 0.0, %v264
    %v273 = vadd.f32 %v200, %v271
    %v274 = vadd.f32 %v192, %v263
    %v275 = vadd.f32 %v201, %v272
    %v276 = vadd.f32 %v195, %v266
    %s277 = scalar_lea.vmem [#allocation2], 4
    %v278 = vld [vmem:[%s277] sm:$0x3]
    %v280 = vsel %vm133, %v278, 0
    %282 = vmatprep.subr.bf16.mxu0 0
    %283 = vmatpush1.bf16.msra.mxu0 0
    %284 = vmatprep.subr.bf16.mxu0 0
    %285 = vmatpush1.bf16.msra.mxu0 0
    %286 = vmatprep.subr.bf16.mxu0 0
    %287 = vmatpush1.bf16.msra.mxu0 0
    %288 = vmatprep.subr.bf16.mxu0 0
    %289 = vmatpush1.bf16.msra.mxu0 0
    %290 = vmatprep.subr.bf16.mxu0 0
    %291 = vmatpush1.bf16.msra.mxu0 0
    %292 = vmatprep.subr.bf16.mxu0 0
    %293 = vmatpush1.bf16.msra.mxu0 0
    %294 = vmatprep.subr.bf16.mxu0 0
    %295 = vmatpush1.bf16.msra.mxu0 0
    %296 = vmatprep.subr.bf16.mxu0 0
    %297 = vmatpush1.bf16.msra.mxu0 %v280
    %298 = vmatprep.subr.bf16.mxu0 0
    %299 = vmatpush2.bf16.msra.mxu0 0
    %300 = vmatprep.subr.bf16.mxu0 0
    %301 = vmatpush2.bf16.msra.mxu0 0
    %302 = vmatprep.subr.bf16.mxu0 0
    %303 = vmatpush2.bf16.msra.mxu0 0
    %304 = vmatprep.subr.bf16.mxu0 0
    %305 = vmatpush2.bf16.msra.mxu0 0
    %306 = vmatprep.subr.bf16.mxu0 0
    %307 = vmatpush2.bf16.msra.mxu0 0
    %308 = vmatprep.subr.bf16.mxu0 0
    %309 = vmatpush2.bf16.msra.mxu0 0
    %310 = vmatprep.subr.bf16.mxu0 0
    %311 = vmatpush2.bf16.msra.mxu0 0
    %312 = vmatprep.subr.bf16.mxu0 0
    %313 = vmatpush2.bf16.msra.mxu0 0
    %314 = vmatprep.mubr.bf16.mxu0 0
    %315 = vmatmul.mubr.bf16.gmra.mxu0 %v128
    %v316 = vpop.f32.mrf.mxu0
    %v317 = vadd.f32 0.0, %v316
    %v318 = vpop.f32.mrf.mxu0
    %v319 = vpop.f32.mrf.mxu0
    %v320 = vadd.f32 0.0, %v319
    %v321 = vpop.f32.mrf.mxu0
    %322 = vmatprep.mubr.bf16.mxu0 0
    %323 = vmatmul.mubr.bf16.gmra.mxu0 %v131
    %v324 = vpop.f32.mrf.mxu0
    %v325 = vadd.f32 0.0, %v324
    %v326 = vpop.f32.mrf.mxu0
    %v327 = vpop.f32.mrf.mxu0
    %v328 = vadd.f32 0.0, %v327
    %v329 = vpop.f32.mrf.mxu0
    %330 = vdwg.mxu0
    %v331 = vadd.f32 %v273, %v317
    %v332 = vadd.f32 %v274, %v320
    %v333 = vadd.f32 %v275, %v325
    %v334 = vadd.f32 %v276, %v328
    %v335 = vld [vmem:[#allocation5] sm:$0x1]
    %v337 = vlaneseq
    %v338 = vshrl.u32 %v337, 7
    %v339 = vsub.s32 0, %v338
    %v340 = vrot.slane %v335, %v339
    %v342 = vadd.f32 %v331, %v340
    %v343 = vadd.f32 %v332, %v340
    %v344 = vadd.f32 %v333, %v340
    %v345 = vadd.f32 %v334, %v340
    %v346 = vmax.f32 %v342, 0.0
    %v347 = vmax.f32 %v343, 0.0
    %v348 = vmax.f32 %v344, 0.0
    %v349 = vmax.f32 %v345, 0.0
    %v350 = vpack.c.bf16 %v347, %v346
    %v351 = vpack.c.bf16 %v349, %v348
    %v352 = vld [vmem:[%s3] sm:$0xf]
    %vm353 = vcmask 64512
    %v355 = vsel %vm353, %v350, 0
    %v358 = vsel %vm353, %v351, 0
    %vm360 = vcmask 1043456
    %v362 = vsel %vm360, %v352, 0
    %364 = vmatprep.subr.bf16.mxu0 0
    %365 = vmatpush1.bf16.msra.mxu0 0
    %366 = vmatprep.subr.bf16.mxu0 0
    %367 = vmatpush1.bf16.msra.mxu0 0
    %368 = vmatprep.subr.bf16.mxu0 0
    %369 = vmatpush1.bf16.msra.mxu0 0
    %370 = vmatprep.subr.bf16.mxu0 0
    %371 = vmatpush1.bf16.msra.mxu0 0
    %372 = vmatprep.subr.bf16.mxu0 0
    %373 = vmatpush1.bf16.msra.mxu0 0
    %374 = vmatprep.subr.bf16.mxu0 0
    %375 = vmatpush1.bf16.msra.mxu0 0
    %376 = vmatprep.subr.bf16.mxu0 0
    %377 = vmatpush1.bf16.msra.mxu0 0
    %378 = vmatprep.subr.bf16.mxu0 0
    %379 = vmatpush1.bf16.msra.mxu0 %v362
    %380 = vmatprep.subr.bf16.mxu0 0
    %381 = vmatpush2.bf16.msra.mxu0 0
    %382 = vmatprep.subr.bf16.mxu0 0
    %383 = vmatpush2.bf16.msra.mxu0 0
    %384 = vmatprep.subr.bf16.mxu0 0
    %385 = vmatpush2.bf16.msra.mxu0 0
    %386 = vmatprep.subr.bf16.mxu0 0
    %387 = vmatpush2.bf16.msra.mxu0 0
    %388 = vmatprep.subr.bf16.mxu0 0
    %389 = vmatpush2.bf16.msra.mxu0 0
    %390 = vmatprep.subr.bf16.mxu0 0
    %391 = vmatpush2.bf16.msra.mxu0 0
    %392 = vmatprep.subr.bf16.mxu0 0
    %393 = vmatpush2.bf16.msra.mxu0 0
    %394 = vmatprep.subr.bf16.mxu0 0
    %395 = vmatpush2.bf16.msra.mxu0 0
    %396 = vmatprep.mubr.bf16.mxu0 0
    %397 = vmatmul.mubr.bf16.gmra.mxu0 %v355
    %v398 = vpop.f32.mrf.mxu0
    %v399 = vadd.f32 0.0, %v398
    %v400 = vpop.f32.mrf.mxu0
    %v401 = vpop.f32.mrf.mxu0
    %v402 = vadd.f32 0.0, %v401
    %v403 = vpop.f32.mrf.mxu0
    %404 = vmatprep.mubr.bf16.mxu0 0
    %405 = vmatmul.mubr.bf16.gmra.mxu0 %v358
    %v406 = vpop.f32.mrf.mxu0
    %v407 = vadd.f32 0.0, %v406
    %v408 = vpop.f32.mrf.mxu0
    %v409 = vpop.f32.mrf.mxu0
    %v410 = vadd.f32 0.0, %v409
    %v411 = vpop.f32.mrf.mxu0
    %412 = vdwg.mxu0
    %v417 = vrot.slane %v399, 6
    %v418 = vrot.slane %v402, 6
    %v419 = vsel %vm133, %v417, %v418
    %v420 = vrot.slane %v407, 6
    %v421 = vrot.slane %v410, 6
    %v422 = vsel %vm133, %v420, %v421
    %v427 = vsel %vm133, 0.0, %v417
    %v428 = vsel %vm133, 0.0, %v420
    %s429 = scalar_lea.vmem %s3, 4
    %v430 = vld [vmem:[%s429] sm:$0xf]
    %v432 = vsel %vm360, %v430, 0
    %434 = vmatprep.subr.bf16.mxu0 0
    %435 = vmatpush1.bf16.msra.mxu0 0
    %436 = vmatprep.subr.bf16.mxu0 0
    %437 = vmatpush1.bf16.msra.mxu0 0
    %438 = vmatprep.subr.bf16.mxu0 0
    %439 = vmatpush1.bf16.msra.mxu0 0
    %440 = vmatprep.subr.bf16.mxu0 0
    %441 = vmatpush1.bf16.msra.mxu0 0
    %442 = vmatprep.subr.bf16.mxu0 0
    %443 = vmatpush1.bf16.msra.mxu0 0
    %444 = vmatprep.subr.bf16.mxu0 0
    %445 = vmatpush1.bf16.msra.mxu0 0
    %446 = vmatprep.subr.bf16.mxu0 0
    %447 = vmatpush1.bf16.msra.mxu0 0
    %448 = vmatprep.subr.bf16.mxu0 0
    %449 = vmatpush1.bf16.msra.mxu0 %v432
    %450 = vmatprep.subr.bf16.mxu0 0
    %451 = vmatpush2.bf16.msra.mxu0 0
    %452 = vmatprep.subr.bf16.mxu0 0
    %453 = vmatpush2.bf16.msra.mxu0 0
    %454 = vmatprep.subr.bf16.mxu0 0
    %455 = vmatpush2.bf16.msra.mxu0 0
    %456 = vmatprep.subr.bf16.mxu0 0
    %457 = vmatpush2.bf16.msra.mxu0 0
    %458 = vmatprep.subr.bf16.mxu0 0
    %459 = vmatpush2.bf16.msra.mxu0 0
    %460 = vmatprep.subr.bf16.mxu0 0
    %461 = vmatpush2.bf16.msra.mxu0 0
    %462 = vmatprep.subr.bf16.mxu0 0
    %463 = vmatpush2.bf16.msra.mxu0 0
    %464 = vmatprep.subr.bf16.mxu0 0
    %465 = vmatpush2.bf16.msra.mxu0 0
    %466 = vmatprep.mubr.bf16.mxu0 0
    %467 = vmatmul.mubr.bf16.gmra.mxu0 %v355
    %v468 = vpop.f32.mrf.mxu0
    %v469 = vadd.f32 0.0, %v468
    %v470 = vpop.f32.mrf.mxu0
    %v471 = vpop.f32.mrf.mxu0
    %v472 = vadd.f32 0.0, %v471
    %v473 = vpop.f32.mrf.mxu0
    %474 = vmatprep.mubr.bf16.mxu0 0
    %475 = vmatmul.mubr.bf16.gmra.mxu0 %v358
    %v476 = vpop.f32.mrf.mxu0
    %v477 = vadd.f32 0.0, %v476
    %v478 = vpop.f32.mrf.mxu0
    %v479 = vpop.f32.mrf.mxu0
    %v480 = vadd.f32 0.0, %v479
    %v481 = vpop.f32.mrf.mxu0
    %482 = vdwg.mxu0
    %v487 = vrot.slane %v469, 7
    %v488 = vrot.slane %v472, 7
    %v489 = vsel %vm260, %v487, %v488
    %v490 = vrot.slane %v477, 7
    %v491 = vrot.slane %v480, 7
    %v492 = vsel %vm260, %v490, %v491
    %v497 = vsel %vm260, 0.0, %v487
    %v498 = vsel %vm260, 0.0, %v490
    %v499 = vadd.f32 %v427, %v497
    %v500 = vadd.f32 %v419, %v489
    %v501 = vadd.f32 %v428, %v498
    %v502 = vadd.f32 %v422, %v492
    %s503 = scalar_lea.vmem %s3, 8
    %v504 = vld [vmem:[%s503] sm:$0xf]
    %v506 = vsel %vm360, %v504, 0
    %508 = vmatprep.subr.bf16.mxu0 0
    %509 = vmatpush1.bf16.msra.mxu0 0
    %510 = vmatprep.subr.bf16.mxu0 0
    %511 = vmatpush1.bf16.msra.mxu0 0
    %512 = vmatprep.subr.bf16.mxu0 0
    %513 = vmatpush1.bf16.msra.mxu0 0
    %514 = vmatprep.subr.bf16.mxu0 0
    %515 = vmatpush1.bf16.msra.mxu0 0
    %516 = vmatprep.subr.bf16.mxu0 0
    %517 = vmatpush1.bf16.msra.mxu0 0
    %518 = vmatprep.subr.bf16.mxu0 0
    %519 = vmatpush1.bf16.msra.mxu0 0
    %520 = vmatprep.subr.bf16.mxu0 0
    %521 = vmatpush1.bf16.msra.mxu0 0
    %522 = vmatprep.subr.bf16.mxu0 0
    %523 = vmatpush1.bf16.msra.mxu0 %v506
    %524 = vmatprep.subr.bf16.mxu0 0
    %525 = vmatpush2.bf16.msra.mxu0 0
    %526 = vmatprep.subr.bf16.mxu0 0
    %527 = vmatpush2.bf16.msra.mxu0 0
    %528 = vmatprep.subr.bf16.mxu0 0
    %529 = vmatpush2.bf16.msra.mxu0 0
    %530 = vmatprep.subr.bf16.mxu0 0
    %531 = vmatpush2.bf16.msra.mxu0 0
    %532 = vmatprep.subr.bf16.mxu0 0
    %533 = vmatpush2.bf16.msra.mxu0 0
    %534 = vmatprep.subr.bf16.mxu0 0
    %535 = vmatpush2.bf16.msra.mxu0 0
    %536 = vmatprep.subr.bf16.mxu0 0
    %537 = vmatpush2.bf16.msra.mxu0 0
    %538 = vmatprep.subr.bf16.mxu0 0
    %539 = vmatpush2.bf16.msra.mxu0 0
    %540 = vmatprep.mubr.bf16.mxu0 0
    %541 = vmatmul.mubr.bf16.gmra.mxu0 %v355
    %v542 = vpop.f32.mrf.mxu0
    %v543 = vadd.f32 0.0, %v542
    %v544 = vpop.f32.mrf.mxu0
    %v545 = vpop.f32.mrf.mxu0
    %v546 = vadd.f32 0.0, %v545
    %v547 = vpop.f32.mrf.mxu0
    %548 = vmatprep.mubr.bf16.mxu0 0
    %549 = vmatmul.mubr.bf16.gmra.mxu0 %v358
    %v550 = vpop.f32.mrf.mxu0
    %v551 = vadd.f32 0.0, %v550
    %v552 = vpop.f32.mrf.mxu0
    %v553 = vpop.f32.mrf.mxu0
    %v554 = vadd.f32 0.0, %v553
    %v555 = vpop.f32.mrf.mxu0
    %556 = vdwg.mxu0
    %v557 = vadd.f32 %v499, %v543
    %v558 = vadd.f32 %v500, %v546
    %v559 = vadd.f32 %v501, %v551
    %v560 = vadd.f32 %v502, %v554
    %v561 = vld [vmem:[#allocation7] sm:$0x1]
    %v563 = vlaneseq
    %v564 = vshrl.u32 %v563, 7
    %v565 = vsub.s32 0, %v564
    %v566 = vrot.slane %v561, %v565
    %v568 = vadd.f32 %v557, %v566
    %v569 = vadd.f32 %v558, %v566
    %v570 = vadd.f32 %v559, %v566
    %v571 = vadd.f32 %v560, %v566
    %v572 = vmax.f32 %v568, 0.0
    %v573 = vmax.f32 %v569, 0.0
    %v574 = vmax.f32 %v570, 0.0
    %v575 = vmax.f32 %v571, 0.0
    %580 = vrot.lane.b32.xlu0 %v342, 120
    %v581 = vpop.permute.xlu0 %580
    %582 = vrot.lane.b32.xlu0 %v343, 120
    %v583 = vpop.permute.xlu0 %582
    %584 = vrot.lane.b32.xlu0 %v344, 120
    %v585 = vpop.permute.xlu0 %584
    %586 = vrot.lane.b32.xlu0 %v345, 120
    %v587 = vpop.permute.xlu0 %586
    %v592 = vadd.f32 %v572, %v581
    %v593 = vadd.f32 %v573, %v583
    %v594 = vadd.f32 %v574, %v585
    %v595 = vadd.f32 %v575, %v587
    %v596 = vmax.f32 %v592, 0.0
    %v597 = vmax.f32 %v593, 0.0
    %v598 = vmax.f32 %v594, 0.0
    %v599 = vmax.f32 %v595, 0.0
    %v600 = vpack.c.bf16 %v597, %v596
    %v601 = vpack.c.bf16 %v599, %v598
    %v602 = vld [vmem:[%s5] sm:$0xf]
    %v604 = vsel %vm353, %v600, 0
    %v607 = vsel %vm353, %v601, 0
    %v610 = vsel %vm360, %v602, 0
    %612 = vmatprep.subr.bf16.mxu0 0
    %613 = vmatpush1.bf16.msra.mxu0 0
    %614 = vmatprep.subr.bf16.mxu0 0
    %615 = vmatpush1.bf16.msra.mxu0 0
    %616 = vmatprep.subr.bf16.mxu0 0
    %617 = vmatpush1.bf16.msra.mxu0 0
    %618 = vmatprep.subr.bf16.mxu0 0
    %619 = vmatpush1.bf16.msra.mxu0 0
    %620 = vmatprep.subr.bf16.mxu0 0
    %621 = vmatpush1.bf16.msra.mxu0 0
    %622 = vmatprep.subr.bf16.mxu0 0
    %623 = vmatpush1.bf16.msra.mxu0 0
    %624 = vmatprep.subr.bf16.mxu0 0
    %625 = vmatpush1.bf16.msra.mxu0 0
    %626 = vmatprep.subr.bf16.mxu0 0
    %627 = vmatpush1.bf16.msra.mxu0 %v610
    %628 = vmatprep.subr.bf16.mxu0 0
    %629 = vmatpush2.bf16.msra.mxu0 0
    %630 = vmatprep.subr.bf16.mxu0 0
    %631 = vmatpush2.bf16.msra.mxu0 0
    %632 = vmatprep.subr.bf16.mxu0 0
    %633 = vmatpush2.bf16.msra.mxu0 0
    %634 = vmatprep.subr.bf16.mxu0 0
    %635 = vmatpush2.bf16.msra.mxu0 0
    %636 = vmatprep.subr.bf16.mxu0 0
    %637 = vmatpush2.bf16.msra.mxu0 0
    %638 = vmatprep.subr.bf16.mxu0 0
    %639 = vmatpush2.bf16.msra.mxu0 0
    %640 = vmatprep.subr.bf16.mxu0 0
    %641 = vmatpush2.bf16.msra.mxu0 0
    %642 = vmatprep.subr.bf16.mxu0 0
    %643 = vmatpush2.bf16.msra.mxu0 0
    %644 = vmatprep.mubr.bf16.mxu0 0
    %645 = vmatmul.mubr.bf16.gmra.mxu0 %v604
    %v646 = vpop.f32.mrf.mxu0
    %v647 = vadd.f32 0.0, %v646
    %v648 = vpop.f32.mrf.mxu0
    %v649 = vpop.f32.mrf.mxu0
    %v650 = vadd.f32 0.0, %v649
    %v651 = vpop.f32.mrf.mxu0
    %652 = vmatprep.mubr.bf16.mxu0 0
    %653 = vmatmul.mubr.bf16.gmra.mxu0 %v607
    %v654 = vpop.f32.mrf.mxu0
    %v655 = vadd.f32 0.0, %v654
    %v656 = vpop.f32.mrf.mxu0
    %v657 = vpop.f32.mrf.mxu0
    %v658 = vadd.f32 0.0, %v657
    %v659 = vpop.f32.mrf.mxu0
    %660 = vdwg.mxu0
    %v665 = vrot.slane %v647, 4
    %v666 = vrot.slane %v650, 4
    %v667 = vsel %vm360, %v665, %v666
    %v668 = vrot.slane %v655, 4
    %v669 = vrot.slane %v658, 4
    %v670 = vsel %vm360, %v668, %v669
    %v675 = vsel %vm360, 0.0, %v665
    %v676 = vsel %vm360, 0.0, %v668
    %s677 = scalar_lea.vmem %s5, 4
    %v678 = vld [vmem:[%s677] sm:$0xf]
    %v680 = vsel %vm360, %v678, 0
    %682 = vmatprep.subr.bf16.mxu0 0
    %683 = vmatpush1.bf16.msra.mxu0 0
    %684 = vmatprep.subr.bf16.mxu0 0
    %685 = vmatpush1.bf16.msra.mxu0 0
    %686 = vmatprep.subr.bf16.mxu0 0
    %687 = vmatpush1.bf16.msra.mxu0 0
    %688 = vmatprep.subr.bf16.mxu0 0
    %689 = vmatpush1.bf16.msra.mxu0 0
    %690 = vmatprep.subr.bf16.mxu0 0
    %691 = vmatpush1.bf16.msra.mxu0 0
    %692 = vmatprep.subr.bf16.mxu0 0
    %693 = vmatpush1.bf16.msra.mxu0 0
    %694 = vmatprep.subr.bf16.mxu0 0
    %695 = vmatpush1.bf16.msra.mxu0 0
    %696 = vmatprep.subr.bf16.mxu0 0
    %697 = vmatpush1.bf16.msra.mxu0 %v680
    %698 = vmatprep.subr.bf16.mxu0 0
    %699 = vmatpush2.bf16.msra.mxu0 0
    %700 = vmatprep.subr.bf16.mxu0 0
    %701 = vmatpush2.bf16.msra.mxu0 0
    %702 = vmatprep.subr.bf16.mxu0 0
    %703 = vmatpush2.bf16.msra.mxu0 0
    %704 = vmatprep.subr.bf16.mxu0 0
    %705 = vmatpush2.bf16.msra.mxu0 0
    %706 = vmatprep.subr.bf16.mxu0 0
    %707 = vmatpush2.bf16.msra.mxu0 0
    %708 = vmatprep.subr.bf16.mxu0 0
    %709 = vmatpush2.bf16.msra.mxu0 0
    %710 = vmatprep.subr.bf16.mxu0 0
    %711 = vmatpush2.bf16.msra.mxu0 0
    %712 = vmatprep.subr.bf16.mxu0 0
    %713 = vmatpush2.bf16.msra.mxu0 0
    %714 = vmatprep.mubr.bf16.mxu0 0
    %715 = vmatmul.mubr.bf16.gmra.mxu0 %v604
    %v716 = vpop.f32.mrf.mxu0
    %v717 = vadd.f32 0.0, %v716
    %v718 = vpop.f32.mrf.mxu0
    %v719 = vpop.f32.mrf.mxu0
    %v720 = vadd.f32 0.0, %v719
    %v721 = vpop.f32.mrf.mxu0
    %722 = vmatprep.mubr.bf16.mxu0 0
    %723 = vmatmul.mubr.bf16.gmra.mxu0 %v607
    %v724 = vpop.f32.mrf.mxu0
    %v725 = vadd.f32 0.0, %v724
    %v726 = vpop.f32.mrf.mxu0
    %v727 = vpop.f32.mrf.mxu0
    %v728 = vadd.f32 0.0, %v727
    %v729 = vpop.f32.mrf.mxu0
    %730 = vdwg.mxu0
    %v735 = vrot.slane %v717, 6
    %v736 = vrot.slane %v720, 6
    %v737 = vsel %vm133, %v735, %v736
    %v738 = vrot.slane %v725, 6
    %v739 = vrot.slane %v728, 6
    %v740 = vsel %vm133, %v738, %v739
    %v745 = vsel %vm133, 0.0, %v735
    %v746 = vsel %vm133, 0.0, %v738
    %v747 = vadd.f32 %v675, %v745
    %v748 = vadd.f32 %v667, %v737
    %v749 = vadd.f32 %v676, %v746
    %v750 = vadd.f32 %v670, %v740
    %s751 = scalar_lea.vmem %s5, 8
    %v752 = vld [vmem:[%s751] sm:$0xf]
    %v754 = vsel %vm360, %v752, 0
    %756 = vmatprep.subr.bf16.mxu0 0
    %757 = vmatpush1.bf16.msra.mxu0 0
    %758 = vmatprep.subr.bf16.mxu0 0
    %759 = vmatpush1.bf16.msra.mxu0 0
    %760 = vmatprep.subr.bf16.mxu0 0
    %761 = vmatpush1.bf16.msra.mxu0 0
    %762 = vmatprep.subr.bf16.mxu0 0
    %763 = vmatpush1.bf16.msra.mxu0 0
    %764 = vmatprep.subr.bf16.mxu0 0
    %765 = vmatpush1.bf16.msra.mxu0 0
    %766 = vmatprep.subr.bf16.mxu0 0
    %767 = vmatpush1.bf16.msra.mxu0 0
    %768 = vmatprep.subr.bf16.mxu0 0
    %769 = vmatpush1.bf16.msra.mxu0 0
    %770 = vmatprep.subr.bf16.mxu0 0
    %771 = vmatpush1.bf16.msra.mxu0 %v754
    %772 = vmatprep.subr.bf16.mxu0 0
    %773 = vmatpush2.bf16.msra.mxu0 0
    %774 = vmatprep.subr.bf16.mxu0 0
    %775 = vmatpush2.bf16.msra.mxu0 0
    %776 = vmatprep.subr.bf16.mxu0 0
    %777 = vmatpush2.bf16.msra.mxu0 0
    %778 = vmatprep.subr.bf16.mxu0 0
    %779 = vmatpush2.bf16.msra.mxu0 0
    %780 = vmatprep.subr.bf16.mxu0 0
    %781 = vmatpush2.bf16.msra.mxu0 0
    %782 = vmatprep.subr.bf16.mxu0 0
    %783 = vmatpush2.bf16.msra.mxu0 0
    %784 = vmatprep.subr.bf16.mxu0 0
    %785 = vmatpush2.bf16.msra.mxu0 0
    %786 = vmatprep.subr.bf16.mxu0 0
    %787 = vmatpush2.bf16.msra.mxu0 0
    %788 = vmatprep.mubr.bf16.mxu0 0
    %789 = vmatmul.mubr.bf16.gmra.mxu0 %v604
    %v790 = vpop.f32.mrf.mxu0
    %v791 = vadd.f32 0.0, %v790
    %v792 = vpop.f32.mrf.mxu0
    %v793 = vpop.f32.mrf.mxu0
    %v794 = vadd.f32 0.0, %v793
    %v795 = vpop.f32.mrf.mxu0
    %796 = vmatprep.mubr.bf16.mxu0 0
    %797 = vmatmul.mubr.bf16.gmra.mxu0 %v607
    %v798 = vpop.f32.mrf.mxu0
    %v799 = vadd.f32 0.0, %v798
    %v800 = vpop.f32.mrf.mxu0
    %v801 = vpop.f32.mrf.mxu0
    %v802 = vadd.f32 0.0, %v801
    %v803 = vpop.f32.mrf.mxu0
    %804 = vdwg.mxu0
    %v805 = vadd.f32 %v747, %v791
    %v806 = vadd.f32 %v748, %v794
    %v807 = vadd.f32 %v749, %v799
    %v808 = vadd.f32 %v750, %v802
    %v809 = vld [vmem:[#allocation8] sm:$0x1]
    %v811 = vlaneseq
    %v812 = vshrl.u32 %v811, 7
    %v813 = vsub.s32 0, %v812
    %v814 = vrot.slane %v809, %v813
    %v816 = vadd.f32 %v805, %v814
    %v817 = vadd.f32 %v806, %v814
    %v818 = vadd.f32 %v807, %v814
    %v819 = vadd.f32 %v808, %v814
    %v820 = vmax.f32 %v816, 0.0
    %v821 = vmax.f32 %v817, 0.0
    %v822 = vmax.f32 %v818, 0.0
    %v823 = vmax.f32 %v819, 0.0
    %v824 = vpack.c.bf16 %v821, %v820
    %v825 = vpack.c.bf16 %v823, %v822
    %v826 = vld [vmem:[#allocation10] sm:$0xf]
    %v828 = vsel %vm353, %v824, 0
    %v831 = vsel %vm353, %v825, 0
    %v834 = vsel %vm360, %v826, 0
    %836 = vmatprep.subr.bf16.mxu0 0
    %837 = vmatpush1.bf16.msra.mxu0 0
    %838 = vmatprep.subr.bf16.mxu0 0
    %839 = vmatpush1.bf16.msra.mxu0 0
    %840 = vmatprep.subr.bf16.mxu0 0
    %841 = vmatpush1.bf16.msra.mxu0 0
    %842 = vmatprep.subr.bf16.mxu0 0
    %843 = vmatpush1.bf16.msra.mxu0 0
    %844 = vmatprep.subr.bf16.mxu0 0
    %845 = vmatpush1.bf16.msra.mxu0 0
    %846 = vmatprep.subr.bf16.mxu0 0
    %847 = vmatpush1.bf16.msra.mxu0 0
    %848 = vmatprep.subr.bf16.mxu0 0
    %849 = vmatpush1.bf16.msra.mxu0 0
    %850 = vmatprep.subr.bf16.mxu0 0
    %851 = vmatpush1.bf16.msra.mxu0 %v834
    %852 = vmatprep.subr.bf16.mxu0 0
    %853 = vmatpush2.bf16.msra.mxu0 0
    %854 = vmatprep.subr.bf16.mxu0 0
    %855 = vmatpush2.bf16.msra.mxu0 0
    %856 = vmatprep.subr.bf16.mxu0 0
    %857 = vmatpush2.bf16.msra.mxu0 0
    %858 = vmatprep.subr.bf16.mxu0 0
    %859 = vmatpush2.bf16.msra.mxu0 0
    %860 = vmatprep.subr.bf16.mxu0 0
    %861 = vmatpush2.bf16.msra.mxu0 0
    %862 = vmatprep.subr.bf16.mxu0 0
    %863 = vmatpush2.bf16.msra.mxu0 0
    %864 = vmatprep.subr.bf16.mxu0 0
    %865 = vmatpush2.bf16.msra.mxu0 0
    %866 = vmatprep.subr.bf16.mxu0 0
    %867 = vmatpush2.bf16.msra.mxu0 0
    %868 = vmatprep.mubr.bf16.mxu0 0
    %869 = vmatmul.mubr.bf16.gmra.mxu0 %v828
    %v870 = vpop.f32.mrf.mxu0
    %v871 = vadd.f32 0.0, %v870
    %v872 = vpop.f32.mrf.mxu0
    %v873 = vpop.f32.mrf.mxu0
    %v874 = vadd.f32 0.0, %v873
    %v875 = vpop.f32.mrf.mxu0
    %876 = vmatprep.mubr.bf16.mxu0 0
    %877 = vmatmul.mubr.bf16.gmra.mxu0 %v831
    %v878 = vpop.f32.mrf.mxu0
    %v879 = vadd.f32 0.0, %v878
    %v880 = vpop.f32.mrf.mxu0
    %v881 = vpop.f32.mrf.mxu0
    %v882 = vadd.f32 0.0, %v881
    %v883 = vpop.f32.mrf.mxu0
    %884 = vdwg.mxu0
    %v889 = vrot.slane %v871, 4
    %v890 = vrot.slane %v874, 4
    %v891 = vsel %vm360, %v889, %v890
    %v892 = vrot.slane %v879, 4
    %v893 = vrot.slane %v882, 4
    %v894 = vsel %vm360, %v892, %v893
    %s897 = scalar_lea.vmem [#allocation10], 4
    %v898 = vld [vmem:[%s897] sm:$0xf]
    %v900 = vsel %vm360, %v898, 0
    %902 = vmatprep.subr.bf16.mxu0 0
    %903 = vmatpush1.bf16.msra.mxu0 0
    %904 = vmatprep.subr.bf16.mxu0 0
    %905 = vmatpush1.bf16.msra.mxu0 0
    %906 = vmatprep.subr.bf16.mxu0 0
    %907 = vmatpush1.bf16.msra.mxu0 0
    %908 = vmatprep.subr.bf16.mxu0 0
    %909 = vmatpush1.bf16.msra.mxu0 0
    %910 = vmatprep.subr.bf16.mxu0 0
    %911 = vmatpush1.bf16.msra.mxu0 0
    %912 = vmatprep.subr.bf16.mxu0 0
    %913 = vmatpush1.bf16.msra.mxu0 0
    %914 = vmatprep.subr.bf16.mxu0 0
    %915 = vmatpush1.bf16.msra.mxu0 0
    %916 = vmatprep.subr.bf16.mxu0 0
    %917 = vmatpush1.bf16.msra.mxu0 %v900
    %918 = vmatprep.subr.bf16.mxu0 0
    %919 = vmatpush2.bf16.msra.mxu0 0
    %920 = vmatprep.subr.bf16.mxu0 0
    %921 = vmatpush2.bf16.msra.mxu0 0
    %922 = vmatprep.subr.bf16.mxu0 0
    %923 = vmatpush2.bf16.msra.mxu0 0
    %924 = vmatprep.subr.bf16.mxu0 0
    %925 = vmatpush2.bf16.msra.mxu0 0
    %926 = vmatprep.subr.bf16.mxu0 0
    %927 = vmatpush2.bf16.msra.mxu0 0
    %928 = vmatprep.subr.bf16.mxu0 0
    %929 = vmatpush2.bf16.msra.mxu0 0
    %930 = vmatprep.subr.bf16.mxu0 0
    %931 = vmatpush2.bf16.msra.mxu0 0
    %932 = vmatprep.subr.bf16.mxu0 0
    %933 = vmatpush2.bf16.msra.mxu0 0
    %934 = vmatprep.mubr.bf16.mxu0 0
    %935 = vmatmul.mubr.bf16.gmra.mxu0 %v828
    %v936 = vpop.f32.mrf.mxu0
    %v937 = vadd.f32 0.0, %v936
    %v938 = vpop.f32.mrf.mxu0
    %v939 = vpop.f32.mrf.mxu0
    %v940 = vadd.f32 0.0, %v939
    %v941 = vpop.f32.mrf.mxu0
    %942 = vmatprep.mubr.bf16.mxu0 0
    %943 = vmatmul.mubr.bf16.gmra.mxu0 %v831
    %v944 = vpop.f32.mrf.mxu0
    %v945 = vadd.f32 0.0, %v944
    %v946 = vpop.f32.mrf.mxu0
    %v947 = vpop.f32.mrf.mxu0
    %v948 = vadd.f32 0.0, %v947
    %v949 = vpop.f32.mrf.mxu0
    %950 = vdwg.mxu0
    %v955 = vrot.slane %v937, 6
    %v956 = vrot.slane %v940, 6
    %v957 = vsel %vm133, %v955, %v956
    %v958 = vrot.slane %v945, 6
    %v959 = vrot.slane %v948, 6
    %v960 = vsel %vm133, %v958, %v959
    %v963 = vadd.f32 %v891, %v957
    %v964 = vadd.f32 %v894, %v960
    %s965 = scalar_lea.vmem [#allocation10], 8
    %v966 = vld [vmem:[%s965] sm:$0xf]
    %v968 = vsel %vm360, %v966, 0
    %970 = vmatprep.subr.bf16.mxu0 0
    %971 = vmatpush1.bf16.msra.mxu0 0
    %972 = vmatprep.subr.bf16.mxu0 0
    %973 = vmatpush1.bf16.msra.mxu0 0
    %974 = vmatprep.subr.bf16.mxu0 0
    %975 = vmatpush1.bf16.msra.mxu0 0
    %976 = vmatprep.subr.bf16.mxu0 0
    %977 = vmatpush1.bf16.msra.mxu0 0
    %978 = vmatprep.subr.bf16.mxu0 0
    %979 = vmatpush1.bf16.msra.mxu0 0
    %980 = vmatprep.subr.bf16.mxu0 0
    %981 = vmatpush1.bf16.msra.mxu0 0
    %982 = vmatprep.subr.bf16.mxu0 0
    %983 = vmatpush1.bf16.msra.mxu0 0
    %984 = vmatprep.subr.bf16.mxu0 0
    %985 = vmatpush1.bf16.msra.mxu0 %v968
    %986 = vmatprep.subr.bf16.mxu0 0
    %987 = vmatpush2.bf16.msra.mxu0 0
    %988 = vmatprep.subr.bf16.mxu0 0
    %989 = vmatpush2.bf16.msra.mxu0 0
    %990 = vmatprep.subr.bf16.mxu0 0
    %991 = vmatpush2.bf16.msra.mxu0 0
    %992 = vmatprep.subr.bf16.mxu0 0
    %993 = vmatpush2.bf16.msra.mxu0 0
    %994 = vmatprep.subr.bf16.mxu0 0
    %995 = vmatpush2.bf16.msra.mxu0 0
    %996 = vmatprep.subr.bf16.mxu0 0
    %997 = vmatpush2.bf16.msra.mxu0 0
    %998 = vmatprep.subr.bf16.mxu0 0
    %999 = vmatpush2.bf16.msra.mxu0 0
    %1000 = vmatprep.subr.bf16.mxu0 0
    %1001 = vmatpush2.bf16.msra.mxu0 0
    %1002 = vmatprep.mubr.bf16.mxu0 0
    %1003 = vmatmul.mubr.bf16.gmra.mxu0 %v828
    %v1004 = vpop.f32.mrf.mxu0
    %v1005 = vpop.f32.mrf.mxu0
    %v1006 = vpop.f32.mrf.mxu0
    %v1007 = vadd.f32 0.0, %v1006
    %v1008 = vpop.f32.mrf.mxu0
    %1009 = vmatprep.mubr.bf16.mxu0 0
    %1010 = vmatmul.mubr.bf16.gmra.mxu0 %v831
    %v1011 = vpop.f32.mrf.mxu0
    %v1012 = vpop.f32.mrf.mxu0
    %v1013 = vpop.f32.mrf.mxu0
    %v1014 = vadd.f32 0.0, %v1013
    %v1015 = vpop.f32.mrf.mxu0
    %1016 = vdwg.mxu0
    %v1017 = vadd.f32 %v963, %v1007
    %v1018 = vadd.f32 %v964, %v1014
    %v1019 = vld [vmem:[%s8] sm:$0x1]
    %v1021 = vlaneseq
    %v1022 = vshrl.u32 %v1021, 7
    %v1023 = vsub.s32 0, %v1022
    %v1024 = vrot.slane %v1019, %v1023
    %v1026 = vadd.f32 %v1017, %v1024
    %v1027 = vadd.f32 %v1018, %v1024
    %v1028 = vmax.f32 %v1026, 0.0
    %v1029 = vmax.f32 %v1027, 0.0
    %v1030 = vadd.f32 %v1028, %v597
    %v1031 = vadd.f32 %v1029, %v599
    %v1032 = vmax.f32 %v1030, 0.0
    %v1033 = vmax.f32 %v1031, 0.0
    %v1034 = vld [vmem:[%s9] sm:$0x1]
    %v1036 = vlaneseq
    %v1037 = vshrl.u32 %v1036, 7
    %v1038 = vsub.s32 0, %v1037
    %v1039 = vrot.slane %v1034, %v1038
    %v1041 = vmul.f32 %v1032, %v1039
    %v1042 = vmul.f32 %v1033, %v1039
    %v1043 = vld [vmem:[%s10] sm:$0x1]
    %v1045 = vlaneseq
    %v1046 = vshrl.u32 %v1045, 7
    %v1047 = vsub.s32 0, %v1046
    %v1048 = vrot.slane %v1043, %v1047
    %v1050 = vadd.f32 %v1041, %v1048
    %v1051 = vadd.f32 %v1042, %v1048
    %v1054 = vrot.slane %v1051, 7
    %vm1057 = vcmask 64519
    %1058 = vst.msk [vmem:[#allocation11 - $0x7] sm:$0x80] %vm1057, %v1050
    %vm1059 = vcmask 57344
    %1060 = vst.msk [vmem:[#allocation11 + $0x1] sm:$0x1] %vm1059, %v1054
    %v1061 = vld [vmem:[%s11] sm:$0xff]
    %v1062 = vld [vmem:[%s12] sm:$0x1]
    %v1064 = vlaneseq
    %v1065 = vshrl.u32 %v1064, 7
    %v1066 = vsub.s32 0, %v1065
    %v1067 = vrot.slane %v1062, %v1066
    %v1069 = vrot.slane %v1050, 7
    %v1070 = vrot.slane %v1051, 6
    %vm1071 = vcmask 1041409
    %v1072 = vsel %vm1071, %v1070, %v1069
    %v1073 = vsel %vm353, %v1072, 0
    %1075 = vmatprep.subr.mxu0 0.0
    %1076 = vmatpush1.msra.mxu0 0.0
    %1077 = vmatprep.subr.mxu0 0.0
    %1078 = vmatpush1.msra.mxu0 0.0
    %1079 = vmatprep.subr.mxu0 0.0
    %1080 = vmatpush1.msra.mxu0 0.0
    %1081 = vmatprep.subr.mxu0 0.0
    %1082 = vmatpush1.msra.mxu0 0.0
    %1083 = vmatprep.subr.mxu0 0.0
    %1084 = vmatpush1.msra.mxu0 0.0
    %1085 = vmatprep.subr.mxu0 0.0
    %1086 = vmatpush1.msra.mxu0 0.0
    %1087 = vmatprep.subr.mxu0 0.0
    %1088 = vmatpush1.msra.mxu0 0.0
    %1089 = vmatprep.subr.mxu0 0.0
    %1090 = vmatpush1.msra.mxu0 0.0
    %1091 = vmatprep.subr.mxu0 0.0
    %1092 = vmatpush1.msra.mxu0 0.0
    %1093 = vmatprep.subr.mxu0 0.0
    %1094 = vmatpush1.msra.mxu0 0.0
    %1095 = vmatprep.subr.mxu0 0.0
    %1096 = vmatpush1.msra.mxu0 0.0
    %1097 = vmatprep.subr.mxu0 0.0
    %1098 = vmatpush1.msra.mxu0 0.0
    %1099 = vmatprep.subr.mxu0 0.0
    %1100 = vmatpush1.msra.mxu0 0.0
    %1101 = vmatprep.subr.mxu0 0.0
    %1102 = vmatpush1.msra.mxu0 0.0
    %1103 = vmatprep.subr.mxu0 0.0
    %1104 = vmatpush1.msra.mxu0 0.0
    %1105 = vmatprep.subr.mxu0 0.0
    %1106 = vmatpush1.msra.mxu0 %v1061
    %1107 = vmatprep.subr.mxu0 0.0
    %1108 = vmatpush2.msra.mxu0 0.0
    %1109 = vmatprep.subr.mxu0 0.0
    %1110 = vmatpush2.msra.mxu0 0.0
    %1111 = vmatprep.subr.mxu0 0.0
    %1112 = vmatpush2.msra.mxu0 0.0
    %1113 = vmatprep.subr.mxu0 0.0
    %1114 = vmatpush2.msra.mxu0 0.0
    %1115 = vmatprep.subr.mxu0 0.0
    %1116 = vmatpush2.msra.mxu0 0.0
    %1117 = vmatprep.subr.mxu0 0.0
    %1118 = vmatpush2.msra.mxu0 0.0
    %1119 = vmatprep.subr.mxu0 0.0
    %1120 = vmatpush2.msra.mxu0 0.0
    %1121 = vmatprep.subr.mxu0 0.0
    %1122 = vmatpush2.msra.mxu0 0.0
    %1123 = vmatprep.subr.mxu0 0.0
    %1124 = vmatpush2.msra.mxu0 0.0
    %1125 = vmatprep.subr.mxu0 0.0
    %1126 = vmatpush2.msra.mxu0 0.0
    %1127 = vmatprep.subr.mxu0 0.0
    %1128 = vmatpush2.msra.mxu0 0.0
    %1129 = vmatprep.subr.mxu0 0.0
    %1130 = vmatpush2.msra.mxu0 0.0
    %1131 = vmatprep.subr.mxu0 0.0
    %1132 = vmatpush2.msra.mxu0 0.0
    %1133 = vmatprep.subr.mxu0 0.0
    %1134 = vmatpush2.msra.mxu0 0.0
    %1135 = vmatprep.subr.mxu0 0.0
    %1136 = vmatpush2.msra.mxu0 0.0
    %1137 = vmatprep.subr.mxu0 0.0
    %1138 = vmatpush2.msra.mxu0 0.0
    %1139 = vmatprep.mubr.f32.mxu0 0.0
    %1140 = vmatmul.mubr.f32.gmra.mxu0 %v1073
    %v1141 = vpop.f32.mrf.mxu0
    %v1142 = vadd.f32 %v1067, %v1141
    %v1143 = vpop.f32.mrf.mxu0
    %1144 = vdwg.mxu0
    %vm1145 = vcmask 33792
    %1146 = vst.msk [vmem:[#allocation12] sm:$0x3] %vm1145, %v1142
    // Predicated region
    $region74: #{tpu_custom_call.1} parent=1 // pred_check
      _
    $region75: #{tpu_custom_call.1} parent=1 // pred_check_branch
      %1148 = sbr.rel (0) target = $region77
    $region76: #{tpu_custom_call.1} parent=1 // pred_region
      %s1150 = ssub.s32 32, 32
      %1151 = vsyncadd [#allocation4], %s1150
      %s1153 = sshll.u32 [#allocation11], 4
      %s1154 = int_to_ptr.vmem [resolvable:$true] %s1153
      %1156 = dma.vmem_to_hbm [thread:$0]  %s1154, 32, %s13, [#allocation4]
    $region77: #{tpu_custom_call.1} parent=1 // pred_fallthru
      _
    // Predicated region
    $region78: #{tpu_custom_call.1} parent=1 // pred_check
      _
    $region79: #{tpu_custom_call.1} parent=1 // pred_check_branch
      %1158 = sbr.rel (0) target = $region81
    $region80: #{tpu_custom_call.1} parent=1 // pred_region
      %s1160 = ssub.s32 32, 32
      %1161 = vsyncadd [#allocation13], %s1160
      %s1163 = sshll.u32 [#allocation12], 4
      %s1164 = int_to_ptr.vmem [resolvable:$true] %s1163
      %1166 = dma.vmem_to_hbm [thread:$0]  %s1164, 32, %s14, [#allocation13]
    $region81: #{tpu_custom_call.1} parent=1 // pred_fallthru
      _
    // Predicated region
    $region82: #{tpu_custom_call.1} parent=1 // pred_check
      _
    $region83: #{tpu_custom_call.1} parent=1 // pred_check_branch
      %1168 = sbr.rel (0) target = $region85
    $region84: #{tpu_custom_call.1} parent=1 // pred_region
      %1169 = dma.done [#allocation4], 32
    $region85: #{tpu_custom_call.1} parent=1 // pred_fallthru
      _
    // Predicated region
    $region86: #{tpu_custom_call.1} parent=1 // pred_check
      _
    $region87: #{tpu_custom_call.1} parent=1 // pred_check_branch
      %1171 = sbr.rel (0) target = $region89
    $region88: #{tpu_custom_call.1} parent=1 // pred_region
      %1172 = dma.done [#allocation13], 32
    $region89: #{tpu_custom_call.1} parent=1 // pred_fallthru
      _
    %1173 = vsyncpa [#allocation3], 1
    %1174 = vsyncpa [#allocation6], 1
    %1175 = vsyncpa [#allocation9], 1
    %1176 = vsyncpa [#allocation4], 1
    %1177 = vsyncpa [#allocation13], 1

</llo_original>
